<compile_context>
chip_gen: v5e
topology: v5e:2x2
jax: 0.10.0
libtpu: 0.0.40
codegen_flags: <defaults>
</compile_context>

<pallas_src>
import jax
import jax.numpy as jnp
from jax.experimental import pallas as pl
from jax.experimental.pallas import tpu as pltpu


def _round_up(x, m):
    return (x + m - 1) // m * m


def sage_mean_kernel(adj_ref, p_ref, fdst_ref, wself_ref, bias_ref, invdeg_ref,
                     out_ref):
    k = pl.program_id(2)

    @pl.when(k == 0)
    def _init():
        out_ref[...] = jnp.zeros_like(out_ref)

    # Hot loop: one MXU op per k step.  int8 (0/1) adjacency is upcast in
    # registers (two-step cast keeps the lowering trivially legal; values are
    # 0/1 so it is lossless).
    adj_bf = adj_ref[...].astype(jnp.float32).astype(jnp.bfloat16)
    out_ref[...] += jnp.dot(adj_bf, p_ref[...],
                            preferred_element_type=jnp.float32)

    @pl.when(k == pl.num_programs(2) - 1)
    def _finalize():
        # Self branch + mean scaling + bias, fused once per output tile.
        self_proj = jnp.dot(fdst_ref[...], wself_ref[...],
                            preferred_element_type=jnp.float32)
        out_ref[...] = (out_ref[...] * invdeg_ref[...]
                        + self_proj + bias_ref[...])


def sage_conv_mean(adj, feat_src, feat_dst, weight, bias,
                   *, tm=256, tk=256, tn=None):
    """SAGEConv forward, mean aggregator.

    adj      : (N_dst, N_src) dense 0/1 adjacency
    feat_src : (N_src, F_in)
    feat_dst : (N_dst, F_in)
    weight   : (F_out, 2*F_in)  fc_neigh.weight (PyTorch layout: [self | neigh])
    bias     : (F_out,)
    returns  : (N_dst, F_out) float32
    """
    n_dst, n_src = adj.shape
    f_in = feat_src.shape[1]
    f_out = weight.shape[0]

    lane = 128
    tm = min(tm, _round_up(n_dst, lane))
    tk = min(tk, _round_up(n_src, lane))
    n_dst_p = _round_up(n_dst, tm)
    n_src_p = _round_up(n_src, tk)
    f_in_p = _round_up(f_in, lane)
    f_out_p = _round_up(f_out, lane)

    # tn = full padded F_out (grid_j == 1 -> adjacency read exactly once),
    # shrunk only if the per-step footprint would blow the v7x 64 MiB VMEM.
    if tn is None:
        tn = f_out_p

    def vmem_est(tn_):
        # Conservative: everything counted double-buffered.
        return 2 * (tm * tk * 1            # adj tile (int8)
                    + tk * tn_ * 2         # P tile (bf16)
                    + tm * f_in_p * 2      # feat_dst tile (bf16)
                    + f_in_p * tn_ * 2     # W_self tile (bf16)
                    + tn_ * 4              # bias (f32)
                    + tm * 4               # inv_deg (f32)
                    + tm * tn_ * 4)        # resident f32 output block

    budget = 44 * 1024 * 1024              # safe on v7x (64 MiB physical/TC)
    while vmem_est(tn) > budget and tn > lane:
        tn = max(lane, (tn // 2) // lane * lane)
    f_out_p = _round_up(f_out, tn)

    # Split fc_neigh weight into self / neighbor halves, transposed to (F_in, F_out).
    w_self_t = weight[:, :f_in].T
    w_neigh_t = weight[:, f_in:].T

    # --- Hoisted precomputes (plain XLA, as recommended) -------------------
    # Neighbor projection: P = feat_src @ W_neigh^T, bf16 MXU operands, f32
    # accumulation, rounded to bf16 exactly once for the adjacency matmul.
    p = jnp.dot(feat_src.astype(jnp.bfloat16), w_neigh_t.astype(jnp.bfloat16),
                preferred_element_type=jnp.float32).astype(jnp.bfloat16)
    # Exact per-row 1/degree (zero-in-degree rows -> neighbor term stays 0).
    deg = jnp.sum(adj.astype(jnp.float32), axis=1, keepdims=True)
    inv_deg = 1.0 / jnp.maximum(deg, 1.0)
    # ------------------------------------------------------------------------

    def pad2(x, rows, cols, dtype):
        return jnp.pad(x.astype(dtype),
                       ((0, rows - x.shape[0]), (0, cols - x.shape[1])))

    adj_p = pad2(adj, n_dst_p, n_src_p, jnp.int8)          # 0/1 -> int8: half the HBM stream
    p_p = pad2(p, n_src_p, f_out_p, jnp.bfloat16)
    fdst_p = pad2(feat_dst, n_dst_p, f_in_p, jnp.bfloat16)
    wself_p = pad2(w_self_t, f_in_p, f_out_p, jnp.bfloat16)
    bias_p = pad2(bias.reshape(1, f_out), 1, f_out_p, jnp.float32)
    invdeg_p = pad2(inv_deg, n_dst_p, 1, jnp.float32)

    grid = (n_dst_p // tm, f_out_p // tn, n_src_p // tk)
    vmem_limit = int(min(100 * 1024 * 1024,
                         max(32 * 1024 * 1024, vmem_est(tn) + 8 * 1024 * 1024)))

    # NOTE: on v7x keep grid[0]*grid[1] >= 2 for real problem sizes so both
    # TensorCores get work; the demo shapes below collapse to a single block.
    out = pl.pallas_call(
        sage_mean_kernel,
        out_shape=jax.ShapeDtypeStruct((n_dst_p, f_out_p), jnp.float32),
        grid_spec=pltpu.PrefetchScalarGridSpec(
            num_scalar_prefetch=0,
            grid=grid,
            in_specs=[
                pl.BlockSpec((tm, tk), lambda i, j, k: (i, k)),       # adj (int8)
                pl.BlockSpec((tk, tn), lambda i, j, k: (k, j)),       # P = X @ W_neigh
                pl.BlockSpec((tm, f_in_p), lambda i, j, k: (i, 0)),   # feat_dst
                pl.BlockSpec((f_in_p, tn), lambda i, j, k: (0, j)),   # W_self^T
                pl.BlockSpec((1, tn), lambda i, j, k: (0, j)),        # bias
                pl.BlockSpec((tm, 1), lambda i, j, k: (i, 0)),        # 1/deg
            ],
            out_specs=pl.BlockSpec((tm, tn), lambda i, j, k: (i, j)),
        ),
        compiler_params=pltpu.CompilerParams(
            dimension_semantics=("parallel", "parallel", "arbitrary"),
            vmem_limit_bytes=vmem_limit,
        ),
    )(adj_p, p_p, fdst_p, wself_p, bias_p, invdeg_p)

    return out[:n_dst, :f_out]


def _xavier_uniform(key, shape, gain):
    fan_out, fan_in = shape
    bound = gain * (6.0 / (fan_in + fan_out)) ** 0.5
    return jax.random.uniform(key, shape, jnp.float32, -bound, bound)


if __name__ == "__main__":
    # Bipartite sampling block: 384 src nodes -> 256 dst nodes (dst is a prefix
    # of src), in_feats=96, out_feats=80 (exercises the padding path as well).
    N_SRC, N_DST, F_IN, F_OUT = 384, 256, 96, 80

    key = jax.random.PRNGKey(0)
    k_feat, k_adj, k_w, k_b = jax.random.split(key, 4)

    feat = jax.random.normal(k_feat, (N_SRC, F_IN), jnp.float32)
    feat_src = feat
    feat_dst = feat[:N_DST]   # graph.is_block: dst nodes are a prefix of src nodes

    # Dense adjacency; every dst node has at least one in-edge.
    adj = (jax.random.uniform(k_adj, (N_DST, N_SRC)) < 0.3).astype(jnp.float32)
    adj = adj.at[jnp.arange(N_DST), jnp.arange(N_DST) % N_SRC].set(1.0)

    # fc_neigh: Linear(2*F_IN, F_OUT), xavier_uniform(gain=relu), default bias init.
    gain = 2.0 ** 0.5
    weight = _xavier_uniform(k_w, (F_OUT, 2 * F_IN), gain)
    bias_bound = 1.0 / (2 * F_IN) ** 0.5
    bias = jax.random.uniform(k_b, (F_OUT,), jnp.float32, -bias_bound, bias_bound)

    out = jax.block_until_ready(sage_conv_mean(adj, feat_src, feat_dst, weight, bias))
    assert out.shape == (N_DST, F_OUT)

    # Reference 1: full f32 (module semantics).
    deg = jnp.maximum(jnp.sum(adj, axis=1, keepdims=True), 1.0)
    h_neigh = (adj @ feat_src) / deg
    ref_f32 = jnp.concatenate([feat_dst, h_neigh], axis=1) @ weight.T + bias

    # Reference 2: mirrors the kernel's bf16 MXU inputs and the reassociated
    # (adj @ (X @ W_neigh)) / deg ordering (tight check).
    bf = lambda x: x.astype(jnp.bfloat16).astype(jnp.float32)
    w_self_t = weight[:, :F_IN].T
    w_neigh_t = weight[:, F_IN:].T
    p_bf = (bf(feat_src) @ bf(w_neigh_t)).astype(jnp.bfloat16).astype(jnp.float32)
    ref_bf = (adj @ p_bf) / deg + bf(feat_dst) @ bf(w_self_t) + bias

    assert jnp.allclose(out, ref_bf, atol=1e-2, rtol=1e-2), \
        float(jnp.max(jnp.abs(out - ref_bf)))
    assert jnp.allclose(out, ref_f32, atol=5e-2, rtol=5e-2), \
        float(jnp.max(jnp.abs(out - ref_f32)))

    print("KERNEL_OK")
</pallas_src>

<mosaic_0001>
module attributes {stable_mosaic.version = 11 : i64} {
  func.func @sage_mean_kernel(%arg0: i32, %arg1: i32, %arg2: i32, %arg3: memref<256x256xi8, #tpu.memory_space<vmem>>, %arg4: memref<256x128xbf16, #tpu.memory_space<vmem>>, %arg5: memref<256x128xbf16, #tpu.memory_space<vmem>>, %arg6: memref<128x128xbf16, #tpu.memory_space<vmem>>, %arg7: memref<1x128xf32, #tpu.memory_space<vmem>>, %arg8: memref<256x1xf32, #tpu.memory_space<vmem>>, %arg9: memref<256x128xf32, #tpu.memory_space<vmem>>) attributes {dimension_semantics = [#tpu.dimension_semantics<parallel>, #tpu.dimension_semantics<parallel>, #tpu.dimension_semantics<arbitrary>], iteration_bounds = array<i64: 1, 1, 2>, scalar_prefetch = 0 : i64, scratch_operands = 0 : i64, tpu.core_type = #tpu.core_type<tc>, window_params = [{transform_indices = @transform_0, window_bounds = array<i64: 256, 256>}, {transform_indices = @transform_1, window_bounds = array<i64: 256, 128>}, {transform_indices = @transform_2, window_bounds = array<i64: 256, 128>}, {transform_indices = @transform_3, window_bounds = array<i64: 128, 128>}, {transform_indices = @transform_4, window_bounds = array<i64: 1, 128>}, {transform_indices = @transform_5, window_bounds = array<i64: 256, 1>}, {transform_indices = @transform_6, window_bounds = array<i64: 256, 128>}]} {
    %c0_i32 = arith.constant 0 : i32
    %0 = arith.cmpi eq, %arg2, %c0_i32 : i32
    %1 = arith.extui %0 : i1 to i32
    %c0_i32_0 = arith.constant 0 : i32
    %2 = arith.cmpi ne, %1, %c0_i32_0 : i32
    scf.if %2 {
      %cst_9 = arith.constant 0.000000e+00 : f32
      %14 = vector.broadcast %cst_9 : f32 to vector<256x128xf32>
      %c0_10 = arith.constant 0 : index
      %c0_11 = arith.constant 0 : index
      %15 = vector.load %arg9[%c0_10, %c0_11] : memref<256x128xf32, #tpu.memory_space<vmem>>, vector<256x128xf32>
      tpu.vector_store %arg9[%c0_10, %c0_11], %14 {strides = array<i32>} : memref<256x128xf32, #tpu.memory_space<vmem>>, vector<256x128xf32>,
    } else {
    }
    %c0 = arith.constant 0 : index
    %c0_1 = arith.constant 0 : index
    %3 = vector.load %arg3[%c0, %c0_1] : memref<256x256xi8, #tpu.memory_space<vmem>>, vector<256x256xi8>
    %4 = arith.sitofp %3 : vector<256x256xi8> to vector<256x256xf32>
    %5 = arith.truncf %4 : vector<256x256xf32> to vector<256x256xbf16>
    %c0_2 = arith.constant 0 : index
    %c0_3 = arith.constant 0 : index
    %6 = vector.load %arg9[%c0_2, %c0_3] : memref<256x128xf32, #tpu.memory_space<vmem>>, vector<256x128xf32>
    %c0_4 = arith.constant 0 : index
    %c0_5 = arith.constant 0 : index
    %7 = vector.load %arg4[%c0_4, %c0_5] : memref<256x128xbf16, #tpu.memory_space<vmem>>, vector<256x128xbf16>
    %cst = arith.constant dense<0.000000e+00> : vector<256x128xf32>
    %8 = tpu.matmul %5, %7, %cst {dimension_numbers = #tpu.dot_dimension_numbers<[1], [0], [0], [1], [0, 0, 1, 1], [], []>} : vector<256x256xbf16>, vector<256x128xbf16>, vector<256x128xf32> -> vector<256x128xf32>
    %9 = arith.addf %6, %8 : vector<256x128xf32>
    %c0_6 = arith.constant 0 : index
    %c0_7 = arith.constant 0 : index
    %10 = vector.load %arg9[%c0_6, %c0_7] : memref<256x128xf32, #tpu.memory_space<vmem>>, vector<256x128xf32>
    tpu.vector_store %arg9[%c0_6, %c0_7], %9 {strides = array<i32>} : memref<256x128xf32, #tpu.memory_space<vmem>>, vector<256x128xf32>,
    %c1_i32 = arith.constant 1 : i32
    %11 = arith.cmpi eq, %arg2, %c1_i32 : i32
    %12 = arith.extui %11 : i1 to i32
    %c0_i32_8 = arith.constant 0 : i32
    %13 = arith.cmpi ne, %12, %c0_i32_8 : i32
    scf.if %13 {
      %c0_9 = arith.constant 0 : index
      %c0_10 = arith.constant 0 : index
      %14 = vector.load %arg5[%c0_9, %c0_10] : memref<256x128xbf16, #tpu.memory_space<vmem>>, vector<256x128xbf16>
      %c0_11 = arith.constant 0 : index
      %c0_12 = arith.constant 0 : index
      %15 = vector.load %arg6[%c0_11, %c0_12] : memref<128x128xbf16, #tpu.memory_space<vmem>>, vector<128x128xbf16>
      %cst_13 = arith.constant dense<0.000000e+00> : vector<256x128xf32>
      %16 = tpu.matmul %14, %15, %cst_13 {dimension_numbers = #tpu.dot_dimension_numbers<[1], [0], [0], [1], [0, 0, 1, 1], [], []>} : vector<256x128xbf16>, vector<128x128xbf16>, vector<256x128xf32> -> vector<256x128xf32>
      %c0_14 = arith.constant 0 : index
      %c0_15 = arith.constant 0 : index
      %17 = vector.load %arg9[%c0_14, %c0_15] : memref<256x128xf32, #tpu.memory_space<vmem>>, vector<256x128xf32>
      %c0_16 = arith.constant 0 : index
      %c0_17 = arith.constant 0 : index
      %18 = vector.load %arg8[%c0_16, %c0_17] : memref<256x1xf32, #tpu.memory_space<vmem>>, vector<256x1xf32>
      %19 = vector.broadcast %18 : vector<256x1xf32> to vector<256x128xf32>
      %20 = arith.mulf %17, %19 : vector<256x128xf32>
      %21 = arith.addf %20, %16 : vector<256x128xf32>
      %c0_18 = arith.constant 0 : index
      %c0_19 = arith.constant 0 : index
      %22 = vector.load %arg7[%c0_18, %c0_19] : memref<1x128xf32, #tpu.memory_space<vmem>>, vector<1x128xf32>
      %23 = vector.broadcast %22 : vector<1x128xf32> to vector<256x128xf32>
      %24 = arith.addf %21, %23 : vector<256x128xf32>
      %c0_20 = arith.constant 0 : index
      %c0_21 = arith.constant 0 : index
      %25 = vector.load %arg9[%c0_20, %c0_21] : memref<256x128xf32, #tpu.memory_space<vmem>>, vector<256x128xf32>
      tpu.vector_store %arg9[%c0_20, %c0_21], %24 {strides = array<i32>} : memref<256x128xf32, #tpu.memory_space<vmem>>, vector<256x128xf32>,
    } else {
    }
    return
  }
  func.func @transform_0(%arg0: i32, %arg1: i32, %arg2: i32) -> (i32, i32) {
    %c0_i32 = arith.constant 0 : i32
    return %arg0, %arg2 : i32, i32
  }
  func.func @transform_1(%arg0: i32, %arg1: i32, %arg2: i32) -> (i32, i32) {
    %c0_i32 = arith.constant 0 : i32
    return %arg2, %arg1 : i32, i32
  }
  func.func @transform_2(%arg0: i32, %arg1: i32, %arg2: i32) -> (i32, i32) {
    %c0_i32 = arith.constant 0 : i32
    %c0_i32_0 = arith.constant 0 : i32
    return %arg0, %c0_i32 : i32, i32
  }
  func.func @transform_3(%arg0: i32, %arg1: i32, %arg2: i32) -> (i32, i32) {
    %c0_i32 = arith.constant 0 : i32
    %c0_i32_0 = arith.constant 0 : i32
    return %c0_i32, %arg1 : i32, i32
  }
  func.func @transform_4(%arg0: i32, %arg1: i32, %arg2: i32) -> (i32, i32) {
    %c0_i32 = arith.constant 0 : i32
    %c0_i32_0 = arith.constant 0 : i32
    return %c0_i32, %arg1 : i32, i32
  }
  func.func @transform_5(%arg0: i32, %arg1: i32, %arg2: i32) -> (i32, i32) {
    %c0_i32 = arith.constant 0 : i32
    %c0_i32_0 = arith.constant 0 : i32
    return %arg0, %c0_i32 : i32, i32
  }
  func.func @transform_6(%arg0: i32, %arg1: i32, %arg2: i32) -> (i32, i32) {
    %c0_i32 = arith.constant 0 : i32
    return %arg0, %arg1 : i32, i32
  }
}

</mosaic_0001>

<llo_original>
// kernel: tpu_custom_call.1
$region0: #{tpu_custom_call.1}
  #allocation0 [shape = 'u32[]', space=smem, size = 0x4, offset = 0x4, fixed_abs, tag = 'smem constant byte address 0x4 - core index']
  #allocation1 [shape = 'u32[72,128]{1,0:T(1,128)}', space=vmem, size = 0x9000, scoped, tag = 'internal scratch']
  %s0 = inlined_call_operand.vmem [shape: s8[256,512], index: 0, kind: input, shape index: {}]
  %s1 = inlined_call_operand.hbm [shape: bf16[512,128], index: 1, kind: input, shape index: {}]
  %s2 = inlined_call_operand.hbm [shape: bf16[256,128], index: 2, kind: input, shape index: {}]
  %s3 = inlined_call_operand.hbm [shape: bf16[128,128], index: 3, kind: input, shape index: {}]
  %s4 = inlined_call_operand.vmem [shape: f32[1,128], index: 4, kind: input, shape index: {}]
  %s5 = inlined_call_operand.vmem [shape: f32[256,1], index: 5, kind: input, shape index: {}]
  %s6 = inlined_call_operand.hbm [shape: f32[256,128], index: 6, kind: output, shape index: {}]
  %s7 = sld [smem:[#allocation0]]
  $region100: #{tpu_custom_call.1} parent=0
    _
  %s9 = ssub.s32 1, %s7
  %s10 = scalar_select 0, %s9, %s7
  $region1: #{tpu_custom_call.1} parent=0
    #allocation2 [shape = 'u8[131072]{0}', space=vmem, size = 0x20000, scoped, tag = 'input window, operand 0']
    #allocation3 [shape = 'u8[131072]{0}', space=vmem, size = 0x20000, scoped, tag = 'input window, operand 1']
    #allocation4 [shape = 's32[2]{0}', space=sflag, size = 0x8, scoped, tag = 'scoped memory for tpu_custom_call.1']
    #allocation5 [shape = 's32[2]{0}', space=sflag, size = 0x8, scoped, tag = 'scoped memory for tpu_custom_call.1']
    #allocation6 [shape = 'u8[65536]{0}', space=vmem, size = 0x10000, scoped, tag = 'input window, operand 2, single buffered']
    #allocation7 [shape = 's32[1]{0}', space=sflag, size = 0x4, scoped, tag = 'scoped memory for tpu_custom_call.1']
    #allocation8 [shape = 'u8[32768]{0}', space=vmem, size = 0x8000, scoped, tag = 'input window, operand 3, single buffered']
    #allocation9 [shape = 'u8[131072]{0}', space=vmem, size = 0x20000, scoped, tag = 'output window, operand 0, single buffered']
    %11 = vsyncpa [#allocation4], 0
    %s12 = scalar_lea.sflag [#allocation4], 1
    %13 = vsyncpa %s12, 0
    %14 = vsyncpa [#allocation7], 0
    %15 = vsyncpa [#allocation5], 0
    loop: start=0, step=1, limit=4
    $region2: #{tpu_custom_call.1} parent=1 // loop_pre_header
      _
    $region3: #{tpu_custom_call.1} parent=1 // loop_header
      %s17 = sphi 0, %s21
      %p18 = scmp.ge.s32.totalorder %s17, 4
      %s24 = sphi 0, %s43
      %s25 = sphi 0, %s39
      %s26 = sphi 0, %s35
      %s27 = sphi 0, %s24
      %s28 = sphi 0, %s25
      %s29 = sphi 0, %s26
      %s30 = sphi 0, %s27
      %s31 = sphi 0, %s28
      %s32 = sphi 0, %s29
      %s48 = sphi 0, %s50
      %s51 = sphi 0, %s48
      %s52 = sphi 0, %s51
      %s68 = sphi 0, %s52
      %s76 = sphi 0, %s78
      %s79 = sphi 0, %s76
      %s80 = sphi 0, %s79
      %s96 = sphi 0, %s80
      %s102 = sphi 0, %s104
      %s105 = sphi 0, %s102
      %s106 = sphi 0, %s105
      %s122 = sphi 0, %s106
      %s128 = sphi 0, %s130
      %s131 = sphi 0, %s128
      %s132 = sphi 0, %s131
      %s148 = sphi 0, %s132
      %s154 = sphi 0, %s156
      %s157 = sphi 0, %s154
      %s158 = sphi 0, %s157
      %s174 = sphi 0, %s158
      %s180 = sphi 0, %s182
      %s183 = sphi 0, %s180
      %s184 = sphi 0, %s183
      %s200 = sphi 0, %s184
      %s208 = sphi 0, %s210
      %s211 = sphi 0, %s208
      %s212 = sphi 0, %s211
      %s228 = sphi 0, %s212
    $region4: #{tpu_custom_call.1} parent=1 // loop_header_branch
      %20 = sbr.rel (%p18) target = $region8
    $region5: #{tpu_custom_call.1} parent=1 // loop_body
      %s22 = ssub.s32 %s17, 1
      %s23 = ssub.s32 %s17, 2
      %s33 = sadd.s32 1, %s26
      %p34 = scmp.ge.s32.totalorder %s33, 2
      %s35 = scalar_select %p34, 0, %s33
      %s36 = sadd.s32 1, %s25
      %s37 = scalar_select %p34, %s36, %s25
      %p38 = scmp.ge.s32.totalorder %s37, 1
      %s39 = scalar_select %p38, 0, %s37
      %s40 = sadd.s32 1, %s24
      %s41 = scalar_select %p38, %s40, %s24
      %p42 = scmp.ge.s32.totalorder %s41, 1
      %s43 = scalar_select %p42, 0, %s41
      %s44 = ssub.s32 %s24, %s43
      %s45 = ssub.s32 %s26, %s35
      %s46 = sor.u32 %s44, %s45
      %p47 = scmp.eq.s32.totalorder %s46, 0
      %s49 = sadd.s32 %s48, 1
      %s50 = scalar_select %p47, %s48, %s49
      %p53 = pneg %p47
      %p54 = scmp.eq.s32.totalorder %s17, 1
      %p55 = por %p53, %p54
      %p56 = scmp.ne.s32.totalorder %s48, %s51
      %p57 = scmp.eq.s32.totalorder %s17, 0
      %p58 = por %p56, %p57
      %p59 = scmp.ne.s32.totalorder %s48, %s51
      %p60 = scmp.eq.s32.totalorder %s22, 1
      %p61 = por %p59, %p60
      %p62 = scmp.ne.s32.totalorder %s51, %s52
      %p63 = scmp.eq.s32.totalorder %s22, 0
      %p64 = por %p62, %p63
      %p65 = scmp.ne.s32.totalorder %s51, %s52
      %p66 = scmp.eq.s32.totalorder %s23, 1
      %p67 = por %p65, %p66
      %p69 = scmp.ne.s32.totalorder %s52, %s68
      %p70 = scmp.eq.s32.totalorder %s23, 0
      %p71 = por %p69, %p70
      %s72 = ssub.s32 %s26, %s35
      %s73 = ssub.s32 %s25, %s39
      %s74 = sor.u32 %s72, %s73
      %p75 = scmp.eq.s32.totalorder %s74, 0
      %s77 = sadd.s32 %s76, 1
      %s78 = scalar_select %p75, %s76, %s77
      %p81 = pneg %p75
      %p82 = scmp.eq.s32.totalorder %s17, 1
      %p83 = por %p81, %p82
      %p84 = scmp.ne.s32.totalorder %s76, %s79
      %p85 = scmp.eq.s32.totalorder %s17, 0
      %p86 = por %p84, %p85
      %p87 = scmp.ne.s32.totalorder %s76, %s79
      %p88 = scmp.eq.s32.totalorder %s22, 1
      %p89 = por %p87, %p88
      %p90 = scmp.ne.s32.totalorder %s79, %s80
      %p91 = scmp.eq.s32.totalorder %s22, 0
      %p92 = por %p90, %p91
      %p93 = scmp.ne.s32.totalorder %s79, %s80
      %p94 = scmp.eq.s32.totalorder %s23, 1
      %p95 = por %p93, %p94
      %p97 = scmp.ne.s32.totalorder %s80, %s96
      %p98 = scmp.eq.s32.totalorder %s23, 0
      %p99 = por %p97, %p98
      %s100 = ssub.s32 %s24, %s43
      %p101 = scmp.eq.s32.totalorder %s100, 0
      %s103 = sadd.s32 %s102, 1
      %s104 = scalar_select %p101, %s102, %s103
      %p107 = pneg %p101
      %p108 = scmp.eq.s32.totalorder %s17, 1
      %p109 = por %p107, %p108
      %p110 = scmp.ne.s32.totalorder %s102, %s105
      %p111 = scmp.eq.s32.totalorder %s17, 0
      %p112 = por %p110, %p111
      %p113 = scmp.ne.s32.totalorder %s102, %s105
      %p114 = scmp.eq.s32.totalorder %s22, 1
      %p115 = por %p113, %p114
      %p116 = scmp.ne.s32.totalorder %s105, %s106
      %p117 = scmp.eq.s32.totalorder %s22, 0
      %p118 = por %p116, %p117
      %p119 = scmp.ne.s32.totalorder %s105, %s106
      %p120 = scmp.eq.s32.totalorder %s23, 1
      %p121 = por %p119, %p120
      %p123 = scmp.ne.s32.totalorder %s106, %s122
      %p124 = scmp.eq.s32.totalorder %s23, 0
      %p125 = por %p123, %p124
      %s126 = ssub.s32 %s25, %s39
      %p127 = scmp.eq.s32.totalorder %s126, 0
      %s129 = sadd.s32 %s128, 1
      %s130 = scalar_select %p127, %s128, %s129
      %p133 = pneg %p127
      %p134 = scmp.eq.s32.totalorder %s17, 1
      %p135 = por %p133, %p134
      %p136 = scmp.ne.s32.totalorder %s128, %s131
      %p137 = scmp.eq.s32.totalorder %s17, 0
      %p138 = por %p136, %p137
      %p139 = scmp.ne.s32.totalorder %s128, %s131
      %p140 = scmp.eq.s32.totalorder %s22, 1
      %p141 = por %p139, %p140
      %p142 = scmp.ne.s32.totalorder %s131, %s132
      %p143 = scmp.eq.s32.totalorder %s22, 0
      %p144 = por %p142, %p143
      %p145 = scmp.ne.s32.totalorder %s131, %s132
      %p146 = scmp.eq.s32.totalorder %s23, 1
      %p147 = por %p145, %p146
      %p149 = scmp.ne.s32.totalorder %s132, %s148
      %p150 = scmp.eq.s32.totalorder %s23, 0
      %p151 = por %p149, %p150
      %s152 = ssub.s32 %s25, %s39
      %p153 = scmp.eq.s32.totalorder %s152, 0
      %s155 = sadd.s32 %s154, 1
      %s156 = scalar_select %p153, %s154, %s155
      %p159 = pneg %p153
      %p160 = scmp.eq.s32.totalorder %s17, 1
      %p161 = por %p159, %p160
      %p162 = scmp.ne.s32.totalorder %s154, %s157
      %p163 = scmp.eq.s32.totalorder %s17, 0
      %p164 = por %p162, %p163
      %p165 = scmp.ne.s32.totalorder %s154, %s157
      %p166 = scmp.eq.s32.totalorder %s22, 1
      %p167 = por %p165, %p166
      %p168 = scmp.ne.s32.totalorder %s157, %s158
      %p169 = scmp.eq.s32.totalorder %s22, 0
      %p170 = por %p168, %p169
      %p171 = scmp.ne.s32.totalorder %s157, %s158
      %p172 = scmp.eq.s32.totalorder %s23, 1
      %p173 = por %p171, %p172
      %p175 = scmp.ne.s32.totalorder %s158, %s174
      %p176 = scmp.eq.s32.totalorder %s23, 0
      %p177 = por %p175, %p176
      %s178 = ssub.s32 %s24, %s43
      %p179 = scmp.eq.s32.totalorder %s178, 0
      %s181 = sadd.s32 %s180, 1
      %s182 = scalar_select %p179, %s180, %s181
      %p185 = pneg %p179
      %p186 = scmp.eq.s32.totalorder %s17, 1
      %p187 = por %p185, %p186
      %p188 = scmp.ne.s32.totalorder %s180, %s183
      %p189 = scmp.eq.s32.totalorder %s17, 0
      %p190 = por %p188, %p189
      %p191 = scmp.ne.s32.totalorder %s180, %s183
      %p192 = scmp.eq.s32.totalorder %s22, 1
      %p193 = por %p191, %p192
      %p194 = scmp.ne.s32.totalorder %s183, %s184
      %p195 = scmp.eq.s32.totalorder %s22, 0
      %p196 = por %p194, %p195
      %p197 = scmp.ne.s32.totalorder %s183, %s184
      %p198 = scmp.eq.s32.totalorder %s23, 1
      %p199 = por %p197, %p198
      %p201 = scmp.ne.s32.totalorder %s184, %s200
      %p202 = scmp.eq.s32.totalorder %s23, 0
      %p203 = por %p201, %p202
      %s204 = ssub.s32 %s24, %s43
      %s205 = ssub.s32 %s25, %s39
      %s206 = sor.u32 %s204, %s205
      %p207 = scmp.eq.s32.totalorder %s206, 0
      %s209 = sadd.s32 %s208, 1
      %s210 = scalar_select %p207, %s208, %s209
      %p213 = pneg %p207
      %p214 = scmp.eq.s32.totalorder %s17, 1
      %p215 = por %p213, %p214
      %p216 = scmp.ne.s32.totalorder %s208, %s211
      %p217 = scmp.eq.s32.totalorder %s17, 0
      %p218 = por %p216, %p217
      %p219 = scmp.ne.s32.totalorder %s208, %s211
      %p220 = scmp.eq.s32.totalorder %s22, 1
      %p221 = por %p219, %p220
      %p222 = scmp.ne.s32.totalorder %s211, %s212
      %p223 = scmp.eq.s32.totalorder %s22, 0
      %p224 = por %p222, %p223
      %p225 = scmp.ne.s32.totalorder %s211, %s212
      %p226 = scmp.eq.s32.totalorder %s23, 1
      %p227 = por %p225, %p226
      %p229 = scmp.ne.s32.totalorder %s212, %s228
      %p230 = scmp.eq.s32.totalorder %s23, 0
      %p231 = por %p229, %p230
      %p232 = scmp.le.s32.totalorder 1, %s17
      %p233 = scmp.lt.s32.totalorder %s17, 3
      %p234 = pnand %p232, %p233
      %p235 = pneg %p234
      // Predicated region
      $region9: #{tpu_custom_call.1} parent=5 // pred_check
        _
      $region10: #{tpu_custom_call.1} parent=5 // pred_check_branch
        %237 = sbr.rel (%p234) target = $region12
      $region11: #{tpu_custom_call.1} parent=5 // pred_region
        %s238 = ssub.s32 %s17, 1
        // Predicated region
        $region13: #{tpu_custom_call.1} parent=11 // pred_check
          %p239 = pneg %p118
        $region14: #{tpu_custom_call.1} parent=11 // pred_check_branch
          %241 = sbr.rel (%p239) target = $region16
        $region15: #{tpu_custom_call.1} parent=11 // pred_region
          %s242 = smul.u32 32, %s27
          %244 = vsyncadd [#allocation7], 0
          %s245 = smul.addr %s242, 4
          %s246 = scalar_lea.hbm %s2, %s245
          %s247 = sshll.u32 %s246, 4
          %s248 = int_to_ptr.hbm [resolvable:$true] %s247
          %s249 = sshll.u32 [#allocation6], 4
          %s250 = int_to_ptr.vmem [resolvable:$true] %s249
          %255 = dma.hbm_to_vmem [thread:$0]  %s248, 2048, %s250, [#allocation7], 64, 64, 4
        $region16: #{tpu_custom_call.1} parent=11 // pred_fallthru
          _
        // Predicated region
        $region17: #{tpu_custom_call.1} parent=11 // pred_check
          %p256 = pneg %p144
        $region18: #{tpu_custom_call.1} parent=11 // pred_check_branch
          %258 = sbr.rel (%p256) target = $region20
        $region19: #{tpu_custom_call.1} parent=11 // pred_region
          %260 = vsyncadd [#allocation7], 0
          %s261 = smul.addr %s28, 4
          %s262 = scalar_lea.hbm %s3, %s261
          %s263 = sshll.u32 %s262, 4
          %s264 = int_to_ptr.hbm [resolvable:$true] %s263
          %s265 = sshll.u32 [#allocation8], 4
          %s266 = int_to_ptr.vmem [resolvable:$true] %s265
          %271 = dma.hbm_to_vmem [thread:$0]  %s264, 1024, %s266, [#allocation7], 64, 64, 4
        $region20: #{tpu_custom_call.1} parent=11 // pred_fallthru
          _
        // Predicated region
        $region21: #{tpu_custom_call.1} parent=11 // pred_check
          %p272 = pneg %p170
        $region22: #{tpu_custom_call.1} parent=11 // pred_check_branch
          %274 = sbr.rel (%p272) target = $region24
        $region23: #{tpu_custom_call.1} parent=11 // pred_region
          %p275 = scmp.lt.s32.totalorder %s28, 0
          %s276 = scalar_select %p275, %s28, 0
          %s277 = scalar_lea.vmem %s4, %s276
        $region24: #{tpu_custom_call.1} parent=11 // pred_fallthru
          _
        // Predicated region
        $region25: #{tpu_custom_call.1} parent=11 // pred_check
          %p278 = pneg %p196
        $region26: #{tpu_custom_call.1} parent=11 // pred_check_branch
          %280 = sbr.rel (%p278) target = $region28
        $region27: #{tpu_custom_call.1} parent=11 // pred_region
          %s281 = smul.u32 32, %s27
          %p282 = scmp.lt.s32.totalorder %s281, 31
          %s283 = scalar_select %p282, %s281, 31
          %s284 = smul.addr %s283, 8
          %s285 = scalar_lea.vmem %s5, %s284
          %s286 = smul.u32 32, %s27
        $region28: #{tpu_custom_call.1} parent=11 // pred_fallthru
          _
      $region12: #{tpu_custom_call.1} parent=5 // pred_fallthru
        _
      %p287 = scmp.lt.s32.totalorder %s17, 2
      // Predicated region
      $region29: #{tpu_custom_call.1} parent=5 // pred_check
        %p288 = pneg %p287
      $region30: #{tpu_custom_call.1} parent=5 // pred_check_branch
        %290 = sbr.rel (%p288) target = $region32
      $region31: #{tpu_custom_call.1} parent=5 // pred_region
        // Predicated region
        $region33: #{tpu_custom_call.1} parent=31 // pred_check
          %p291 = pneg %p58
        $region34: #{tpu_custom_call.1} parent=31 // pred_check_branch
          %293 = sbr.rel (%p291) target = $region36
        $region35: #{tpu_custom_call.1} parent=31 // pred_region
          %s294 = sand.u32 %s48, 1
          %s295 = sand.u32 %s48, 1
          %s296 = smul.addr %s295, 128
          %s297 = scalar_lea.vmem [#allocation2], %s296
          %s298 = smul.u32 8, %s24
          %s299 = smul.u32 2, %s26
          %s300 = smul.addr %s298, 4
          %s301 = sadd.s32 %s299, %s300
          %s302 = smul.addr %s301, 8
          %s303 = scalar_lea.vmem %s0, %s302
          // Predicated region
          $region37: #{tpu_custom_call.1} parent=35 // pred_check
            _
          $region38: #{tpu_custom_call.1} parent=35 // pred_check_branch
            %305 = sbr.rel (0) target = $region40
          $region39: #{tpu_custom_call.1} parent=35 // pred_region
            // Predicated region
            $region41: #{tpu_custom_call.1} parent=39 // pred_check
              _
            $region42: #{tpu_custom_call.1} parent=39 // pred_check_branch
              %307 = sbr.rel (0) target = $region44
            $region43: #{tpu_custom_call.1} parent=39 // pred_region
              loop: start=0, step=1, limit=1
              $region45: #{tpu_custom_call.1} parent=43 // loop_pre_header
                _
              $region46: #{tpu_custom_call.1} parent=43 // loop_header
                %s309 = sphi 0, %s313
                %p310 = scmp.ge.s32.totalorder %s309, 1
                %s314 = sphi %s303, %s303
                %s315 = sphi %s297, %s297
              $region47: #{tpu_custom_call.1} parent=43 // loop_header_branch
                %312 = sbr.rel (%p310) target = $region51
              $region48: #{tpu_custom_call.1} parent=43 // loop_body
                %v316 = vld [vmem:[%s314] sm:$0xff]
                %317 = vst [vmem:[%s315] sm:$0xff] %v316
                %v318 = vld [vmem:[%s314 + $0x8] sm:$0xff]
                %319 = vst [vmem:[%s315 + $0x8] sm:$0xff] %v318
                %v320 = vld [vmem:[%s314 + $0x20] sm:$0xff]
                %321 = vst [vmem:[%s315 + $0x10] sm:$0xff] %v320
                %v322 = vld [vmem:[%s314 + $0x28] sm:$0xff]
                %323 = vst [vmem:[%s315 + $0x18] sm:$0xff] %v322
                %v324 = vld [vmem:[%s314 + $0x40] sm:$0xff]
                %325 = vst [vmem:[%s315 + $0x20] sm:$0xff] %v324
                %v326 = vld [vmem:[%s314 + $0x48] sm:$0xff]
                %327 = vst [vmem:[%s315 + $0x28] sm:$0xff] %v326
                %v328 = vld [vmem:[%s314 + $0x60] sm:$0xff]
                %329 = vst [vmem:[%s315 + $0x30] sm:$0xff] %v328
                %v330 = vld [vmem:[%s314 + $0x68] sm:$0xff]
                %331 = vst [vmem:[%s315 + $0x38] sm:$0xff] %v330
                %v332 = vld [vmem:[%s314 + $0x80] sm:$0xff]
                %333 = vst [vmem:[%s315 + $0x40] sm:$0xff] %v332
                %v334 = vld [vmem:[%s314 + $0x88] sm:$0xff]
                %335 = vst [vmem:[%s315 + $0x48] sm:$0xff] %v334
                %v336 = vld [vmem:[%s314 + $0xa0] sm:$0xff]
                %337 = vst [vmem:[%s315 + $0x50] sm:$0xff] %v336
                %v338 = vld [vmem:[%s314 + $0xa8] sm:$0xff]
                %339 = vst [vmem:[%s315 + $0x58] sm:$0xff] %v338
                %v340 = vld [vmem:[%s314 + $0xc0] sm:$0xff]
                %341 = vst [vmem:[%s315 + $0x60] sm:$0xff] %v340
                %v342 = vld [vmem:[%s314 + $0xc8] sm:$0xff]
                %343 = vst [vmem:[%s315 + $0x68] sm:$0xff] %v342
                %v344 = vld [vmem:[%s314 + $0xe0] sm:$0xff]
                %345 = vst [vmem:[%s315 + $0x70] sm:$0xff] %v344
                %v346 = vld [vmem:[%s314 + $0xe8] sm:$0xff]
                %347 = vst [vmem:[%s315 + $0x78] sm:$0xff] %v346
              $region49: #{tpu_custom_call.1} parent=43 // loop_footer
                %s313 = sadd.s32 1, %s309
              $region50: #{tpu_custom_call.1} parent=43 // loop_footer_branch
                %308 = sbr.rel target = $region46
              $region51: #{tpu_custom_call.1} parent=43 // loop_exit
                _
            $region44: #{tpu_custom_call.1} parent=39 // pred_fallthru
              _
            // Predicated region
            $region52: #{tpu_custom_call.1} parent=39 // pred_check
              _
            $region53: #{tpu_custom_call.1} parent=39 // pred_check_branch
              %349 = sbr.rel target = $region55
            $region54: #{tpu_custom_call.1} parent=39 // pred_region
              _
            $region55: #{tpu_custom_call.1} parent=39 // pred_fallthru
              _
          $region40: #{tpu_custom_call.1} parent=35 // pred_fallthru
            _
          %350 = vnop
        $region36: #{tpu_custom_call.1} parent=31 // pred_fallthru
          _
        // Predicated region
        $region56: #{tpu_custom_call.1} parent=31 // pred_check
          %p351 = pneg %p86
        $region57: #{tpu_custom_call.1} parent=31 // pred_check_branch
          %353 = sbr.rel (%p351) target = $region59
        $region58: #{tpu_custom_call.1} parent=31 // pred_region
          %s354 = sand.u32 %s76, 1
          %s355 = scalar_lea.sflag [#allocation4], %s354
          %s356 = sand.u32 %s76, 1
          %s357 = smul.addr %s356, 128
          %s358 = scalar_lea.vmem [#allocation3], %s357
          %s359 = smul.u32 32, %s26
          %361 = vsyncadd %s355, 0
          %s362 = sadd.s32 %s25, %s359
          %s363 = smul.addr %s362, 4
          %s364 = scalar_lea.hbm %s1, %s363
          %s365 = sshll.u32 %s364, 4
          %s366 = int_to_ptr.hbm [resolvable:$true] %s365
          %s367 = sshll.u32 %s358, 4
          %s368 = int_to_ptr.vmem [resolvable:$true] %s367
          %373 = dma.hbm_to_vmem [thread:$0]  %s366, 2048, %s368, %s355, 64, 64, 4
        $region59: #{tpu_custom_call.1} parent=31 // pred_fallthru
          _
      $region32: #{tpu_custom_call.1} parent=5 // pred_fallthru
        _
      %p374 = scmp.le.s32.totalorder 1, %s17
      %p375 = scmp.lt.s32.totalorder %s17, 3
      %p376 = pnand %p374, %p375
      %p377 = pneg %p376
      // Predicated region
      $region60: #{tpu_custom_call.1} parent=5 // pred_check
        _
      $region61: #{tpu_custom_call.1} parent=5 // pred_check_branch
        %379 = sbr.rel (%p376) target = $region63
      $region62: #{tpu_custom_call.1} parent=5 // pred_region
        %s380 = ssub.s32 %s17, 1
        %s381 = sand.u32 %s51, 1
        %s382 = sand.u32 %s51, 1
        %s383 = smul.addr %s382, 128
        %s384 = scalar_lea.vmem [#allocation2], %s383
        // Predicated region
        $region64: #{tpu_custom_call.1} parent=62 // pred_check
          %p385 = pneg %p64
        $region65: #{tpu_custom_call.1} parent=62 // pred_check_branch
          %387 = sbr.rel (%p385) target = $region67
        $region66: #{tpu_custom_call.1} parent=62 // pred_region
          _
        $region67: #{tpu_custom_call.1} parent=62 // pred_fallthru
          _
        %s388 = sand.u32 %s79, 1
        %s389 = scalar_lea.sflag [#allocation4], %s388
        %s390 = sand.u32 %s79, 1
        %s391 = smul.addr %s390, 128
        %s392 = scalar_lea.vmem [#allocation3], %s391
        // Predicated region
        $region68: #{tpu_custom_call.1} parent=62 // pred_check
          %p393 = pneg %p92
        $region69: #{tpu_custom_call.1} parent=62 // pred_check_branch
          %395 = sbr.rel (%p393) target = $region71
        $region70: #{tpu_custom_call.1} parent=62 // pred_region
          %397 = dma.done %s389, 2048
        $region71: #{tpu_custom_call.1} parent=62 // pred_fallthru
          _
        // Predicated region
        $region72: #{tpu_custom_call.1} parent=62 // pred_check
          %p398 = pneg %p118
        $region73: #{tpu_custom_call.1} parent=62 // pred_check_branch
          %400 = sbr.rel (%p398) target = $region75
        $region74: #{tpu_custom_call.1} parent=62 // pred_region
          %402 = dma.done [#allocation7], 2048
        $region75: #{tpu_custom_call.1} parent=62 // pred_fallthru
          _
        // Predicated region
        $region76: #{tpu_custom_call.1} parent=62 // pred_check
          %p403 = pneg %p144
        $region77: #{tpu_custom_call.1} parent=62 // pred_check_branch
          %405 = sbr.rel (%p403) target = $region79
        $region78: #{tpu_custom_call.1} parent=62 // pred_region
          %407 = dma.done [#allocation7], 1024
        $region79: #{tpu_custom_call.1} parent=62 // pred_fallthru
          _
        %s408 = sand.u32 %s51, 1
        %s409 = sand.u32 %s51, 1
        %s410 = smul.addr %s409, 128
        %s411 = scalar_lea.vmem [#allocation2], %s410
        %p412 = pneg %p64
        %p413 = pneg %p61
        %s414 = sand.u32 %s79, 1
        %s415 = scalar_lea.sflag [#allocation4], %s414
        %s416 = sand.u32 %s79, 1
        %s417 = smul.addr %s416, 128
        %s418 = scalar_lea.vmem [#allocation3], %s417
        %p419 = pneg %p92
        %p420 = pneg %p89
        %p421 = pneg %p118
        %p422 = pneg %p115
        %p423 = pneg %p144
        %p424 = pneg %p141
        %p425 = scmp.lt.s32.totalorder %s28, 0
        %s426 = scalar_select %p425, %s28, 0
        %s427 = scalar_lea.vmem %s4, %s426
        %p428 = pneg %p170
        %p429 = pneg %p167
        %s430 = smul.u32 32, %s27
        %p431 = scmp.lt.s32.totalorder %s430, 31
        %s432 = scalar_select %p431, %s430, 31
        %s433 = smul.addr %s432, 8
        %s434 = scalar_lea.vmem %s5, %s433
        %p435 = pneg %p196
        %p436 = pneg %p193
        %p437 = pneg %p224
        %p438 = pneg %p221
        %s439 = smul.u32 8, %s27
        %s440 = smul.u32 2, %s29
        %s441 = smul.u32 32, %s29
        %s442 = smul.u32 32, %s27
        %p443 = scmp.lt.s32.totalorder %s28, 0
        %s444 = scalar_select %p443, %s28, 0
        %s445 = scalar_lea.vmem %s4, %s444
        %s446 = smul.u32 32, %s27
        %p447 = scmp.lt.s32.totalorder %s446, 31
        %s448 = scalar_select %p447, %s446, 31
        %s449 = smul.addr %s448, 8
        %s450 = scalar_lea.vmem %s5, %s449
        %s451 = smul.u32 32, %s27
        %s452 = smul.u32 32, %s27
        %p453 = scmp.eq.s32.totalorder %s29, 0
        // Predicated region
        $region80: #{tpu_custom_call.1} parent=62 // pred_check
          %p454 = pneg %p453
        $region81: #{tpu_custom_call.1} parent=62 // pred_check_branch
          %456 = sbr.rel (%p454) target = $region83
        $region82: #{tpu_custom_call.1} parent=62 // pred_region
          %457 = vst [vmem:[#allocation9] sm:$0xff] 0.0
          %458 = vst [vmem:[#allocation9 + $0x8] sm:$0xff] 0.0
          %459 = vst [vmem:[#allocation9 + $0x10] sm:$0xff] 0.0
          %460 = vst [vmem:[#allocation9 + $0x18] sm:$0xff] 0.0
          %461 = vst [vmem:[#allocation9 + $0x20] sm:$0xff] 0.0
          %462 = vst [vmem:[#allocation9 + $0x28] sm:$0xff] 0.0
          %463 = vst [vmem:[#allocation9 + $0x30] sm:$0xff] 0.0
          %464 = vst [vmem:[#allocation9 + $0x38] sm:$0xff] 0.0
          %465 = vst [vmem:[#allocation9 + $0x40] sm:$0xff] 0.0
          %466 = vst [vmem:[#allocation9 + $0x48] sm:$0xff] 0.0
          %467 = vst [vmem:[#allocation9 + $0x50] sm:$0xff] 0.0
          %468 = vst [vmem:[#allocation9 + $0x58] sm:$0xff] 0.0
          %469 = vst [vmem:[#allocation9 + $0x60] sm:$0xff] 0.0
          %470 = vst [vmem:[#allocation9 + $0x68] sm:$0xff] 0.0
          %471 = vst [vmem:[#allocation9 + $0x70] sm:$0xff] 0.0
          %472 = vst [vmem:[#allocation9 + $0x78] sm:$0xff] 0.0
          %473 = vst [vmem:[#allocation9 + $0x80] sm:$0xff] 0.0
          %474 = vst [vmem:[#allocation9 + $0x88] sm:$0xff] 0.0
          %475 = vst [vmem:[#allocation9 + $0x90] sm:$0xff] 0.0
          %476 = vst [vmem:[#allocation9 + $0x98] sm:$0xff] 0.0
          %477 = vst [vmem:[#allocation9 + $0xa0] sm:$0xff] 0.0
          %478 = vst [vmem:[#allocation9 + $0xa8] sm:$0xff] 0.0
          %479 = vst [vmem:[#allocation9 + $0xb0] sm:$0xff] 0.0
          %480 = vst [vmem:[#allocation9 + $0xb8] sm:$0xff] 0.0
          %481 = vst [vmem:[#allocation9 + $0xc0] sm:$0xff] 0.0
          %482 = vst [vmem:[#allocation9 + $0xc8] sm:$0xff] 0.0
          %483 = vst [vmem:[#allocation9 + $0xd0] sm:$0xff] 0.0
          %484 = vst [vmem:[#allocation9 + $0xd8] sm:$0xff] 0.0
          %485 = vst [vmem:[#allocation9 + $0xe0] sm:$0xff] 0.0
          %486 = vst [vmem:[#allocation9 + $0xe8] sm:$0xff] 0.0
          %487 = vst [vmem:[#allocation9 + $0xf0] sm:$0xff] 0.0
          %488 = vst [vmem:[#allocation9 + $0xf8] sm:$0xff] 0.0
        $region83: #{tpu_custom_call.1} parent=62 // pred_fallthru
          _
        %v489 = vld [vmem:[%s384] sm:$0xff]
        %v490 = vld [vmem:[%s384 + $0x8] sm:$0xff]
        %v491 = vld [vmem:[%s384 + $0x10] sm:$0xff]
        %v492 = vld [vmem:[%s384 + $0x18] sm:$0xff]
        %v493 = vld [vmem:[%s384 + $0x20] sm:$0xff]
        %v494 = vld [vmem:[%s384 + $0x28] sm:$0xff]
        %v495 = vld [vmem:[%s384 + $0x30] sm:$0xff]
        %v496 = vld [vmem:[%s384 + $0x38] sm:$0xff]
        %v497 = vld [vmem:[%s384 + $0x40] sm:$0xff]
        %v498 = vld [vmem:[%s384 + $0x48] sm:$0xff]
        %v499 = vld [vmem:[%s384 + $0x50] sm:$0xff]
        %v500 = vld [vmem:[%s384 + $0x58] sm:$0xff]
        %v501 = vld [vmem:[%s384 + $0x60] sm:$0xff]
        %v502 = vld [vmem:[%s384 + $0x68] sm:$0xff]
        %v503 = vld [vmem:[%s384 + $0x70] sm:$0xff]
        %v504 = vld [vmem:[%s384 + $0x78] sm:$0xff]
        %v505 = vunpack.c.0.s8 %v489
        %v506 = vunpack.c.0.s8 %v490
        %v507 = vunpack.c.1.s8 %v489
        %v508 = vunpack.c.1.s8 %v490
        %v509 = vunpack.c.2.s8 %v489
        %v510 = vunpack.c.2.s8 %v490
        %v511 = vunpack.c.3.s8 %v489
        %v512 = vunpack.c.3.s8 %v490
        %v513 = vunpack.c.0.s8 %v491
        %v514 = vunpack.c.0.s8 %v492
        %v515 = vunpack.c.1.s8 %v491
        %v516 = vunpack.c.1.s8 %v492
        %v517 = vunpack.c.2.s8 %v491
        %v518 = vunpack.c.2.s8 %v492
        %v519 = vunpack.c.3.s8 %v491
        %v520 = vunpack.c.3.s8 %v492
        %v521 = vunpack.c.0.s8 %v493
        %v522 = vunpack.c.0.s8 %v494
        %v523 = vunpack.c.1.s8 %v493
        %v524 = vunpack.c.1.s8 %v494
        %v525 = vunpack.c.2.s8 %v493
        %v526 = vunpack.c.2.s8 %v494
        %v527 = vunpack.c.3.s8 %v493
        %v528 = vunpack.c.3.s8 %v494
        %v529 = vunpack.c.0.s8 %v495
        %v530 = vunpack.c.0.s8 %v496
        %v531 = vunpack.c.1.s8 %v495
        %v532 = vunpack.c.1.s8 %v496
        %v533 = vunpack.c.2.s8 %v495
        %v534 = vunpack.c.2.s8 %v496
        %v535 = vunpack.c.3.s8 %v495
        %v536 = vunpack.c.3.s8 %v496
        %v537 = vunpack.c.0.s8 %v497
        %v538 = vunpack.c.0.s8 %v498
        %v539 = vunpack.c.1.s8 %v497
        %v540 = vunpack.c.1.s8 %v498
        %v541 = vunpack.c.2.s8 %v497
        %v542 = vunpack.c.2.s8 %v498
        %v543 = vunpack.c.3.s8 %v497
        %v544 = vunpack.c.3.s8 %v498
        %v545 = vunpack.c.0.s8 %v499
        %v546 = vunpack.c.0.s8 %v500
        %v547 = vunpack.c.1.s8 %v499
        %v548 = vunpack.c.1.s8 %v500
        %v549 = vunpack.c.2.s8 %v499
        %v550 = vunpack.c.2.s8 %v500
        %v551 = vunpack.c.3.s8 %v499
        %v552 = vunpack.c.3.s8 %v500
        %v553 = vunpack.c.0.s8 %v501
        %v554 = vunpack.c.0.s8 %v502
        %v555 = vunpack.c.1.s8 %v501
        %v556 = vunpack.c.1.s8 %v502
        %v557 = vunpack.c.2.s8 %v501
        %v558 = vunpack.c.2.s8 %v502
        %v559 = vunpack.c.3.s8 %v501
        %v560 = vunpack.c.3.s8 %v502
        %v561 = vunpack.c.0.s8 %v503
        %v562 = vunpack.c.0.s8 %v504
        %v563 = vunpack.c.1.s8 %v503
        %v564 = vunpack.c.1.s8 %v504
        %v565 = vunpack.c.2.s8 %v503
        %v566 = vunpack.c.2.s8 %v504
        %v567 = vunpack.c.3.s8 %v503
        %v568 = vunpack.c.3.s8 %v504
        %v569 = vcvt.s32.f32 %v505
        %v570 = vcvt.s32.f32 %v506
        %v571 = vcvt.s32.f32 %v507
        %v572 = vcvt.s32.f32 %v508
        %v573 = vcvt.s32.f32 %v509
        %v574 = vcvt.s32.f32 %v510
        %v575 = vcvt.s32.f32 %v511
        %v576 = vcvt.s32.f32 %v512
        %v577 = vcvt.s32.f32 %v513
        %v578 = vcvt.s32.f32 %v514
        %v579 = vcvt.s32.f32 %v515
        %v580 = vcvt.s32.f32 %v516
        %v581 = vcvt.s32.f32 %v517
        %v582 = vcvt.s32.f32 %v518
        %v583 = vcvt.s32.f32 %v519
        %v584 = vcvt.s32.f32 %v520
        %v585 = vcvt.s32.f32 %v521
        %v586 = vcvt.s32.f32 %v522
        %v587 = vcvt.s32.f32 %v523
        %v588 = vcvt.s32.f32 %v524
        %v589 = vcvt.s32.f32 %v525
        %v590 = vcvt.s32.f32 %v526
        %v591 = vcvt.s32.f32 %v527
        %v592 = vcvt.s32.f32 %v528
        %v593 = vcvt.s32.f32 %v529
        %v594 = vcvt.s32.f32 %v530
        %v595 = vcvt.s32.f32 %v531
        %v596 = vcvt.s32.f32 %v532
        %v597 = vcvt.s32.f32 %v533
        %v598 = vcvt.s32.f32 %v534
        %v599 = vcvt.s32.f32 %v535
        %v600 = vcvt.s32.f32 %v536
        %v601 = vcvt.s32.f32 %v537
        %v602 = vcvt.s32.f32 %v538
        %v603 = vcvt.s32.f32 %v539
        %v604 = vcvt.s32.f32 %v540
        %v605 = vcvt.s32.f32 %v541
        %v606 = vcvt.s32.f32 %v542
        %v607 = vcvt.s32.f32 %v543
        %v608 = vcvt.s32.f32 %v544
        %v609 = vcvt.s32.f32 %v545
        %v610 = vcvt.s32.f32 %v546
        %v611 = vcvt.s32.f32 %v547
        %v612 = vcvt.s32.f32 %v548
        %v613 = vcvt.s32.f32 %v549
        %v614 = vcvt.s32.f32 %v550
        %v615 = vcvt.s32.f32 %v551
        %v616 = vcvt.s32.f32 %v552
        %v617 = vcvt.s32.f32 %v553
        %v618 = vcvt.s32.f32 %v554
        %v619 = vcvt.s32.f32 %v555
        %v620 = vcvt.s32.f32 %v556
        %v621 = vcvt.s32.f32 %v557
        %v622 = vcvt.s32.f32 %v558
        %v623 = vcvt.s32.f32 %v559
        %v624 = vcvt.s32.f32 %v560
        %v625 = vcvt.s32.f32 %v561
        %v626 = vcvt.s32.f32 %v562
        %v627 = vcvt.s32.f32 %v563
        %v628 = vcvt.s32.f32 %v564
        %v629 = vcvt.s32.f32 %v565
        %v630 = vcvt.s32.f32 %v566
        %v631 = vcvt.s32.f32 %v567
        %v632 = vcvt.s32.f32 %v568
        %v633 = vpack.c.bf16 %v571, %v569
        %v634 = vpack.c.bf16 %v572, %v570
        %v635 = vpack.c.bf16 %v575, %v573
        %v636 = vpack.c.bf16 %v576, %v574
        %v637 = vpack.c.bf16 %v579, %v577
        %v638 = vpack.c.bf16 %v580, %v578
        %v639 = vpack.c.bf16 %v583, %v581
        %v640 = vpack.c.bf16 %v584, %v582
        %v641 = vpack.c.bf16 %v587, %v585
        %v642 = vpack.c.bf16 %v588, %v586
        %v643 = vpack.c.bf16 %v591, %v589
        %v644 = vpack.c.bf16 %v592, %v590
        %v645 = vpack.c.bf16 %v595, %v593
        %v646 = vpack.c.bf16 %v596, %v594
        %v647 = vpack.c.bf16 %v599, %v597
        %v648 = vpack.c.bf16 %v600, %v598
        %v649 = vpack.c.bf16 %v603, %v601
        %v650 = vpack.c.bf16 %v604, %v602
        %v651 = vpack.c.bf16 %v607, %v605
        %v652 = vpack.c.bf16 %v608, %v606
        %v653 = vpack.c.bf16 %v611, %v609
        %v654 = vpack.c.bf16 %v612, %v610
        %v655 = vpack.c.bf16 %v615, %v613
        %v656 = vpack.c.bf16 %v616, %v614
        %v657 = vpack.c.bf16 %v619, %v617
        %v658 = vpack.c.bf16 %v620, %v618
        %v659 = vpack.c.bf16 %v623, %v621
        %v660 = vpack.c.bf16 %v624, %v622
        %v661 = vpack.c.bf16 %v627, %v625
        %v662 = vpack.c.bf16 %v628, %v626
        %v663 = vpack.c.bf16 %v631, %v629
        %v664 = vpack.c.bf16 %v632, %v630
        %v665 = vld [vmem:[#allocation9] sm:$0xff]
        %v666 = vld [vmem:[#allocation9 + $0x8] sm:$0xff]
        %v667 = vld [vmem:[#allocation9 + $0x10] sm:$0xff]
        %v668 = vld [vmem:[#allocation9 + $0x18] sm:$0xff]
        %v669 = vld [vmem:[#allocation9 + $0x20] sm:$0xff]
        %v670 = vld [vmem:[#allocation9 + $0x28] sm:$0xff]
        %v671 = vld [vmem:[#allocation9 + $0x30] sm:$0xff]
        %v672 = vld [vmem:[#allocation9 + $0x38] sm:$0xff]
        %v673 = vld [vmem:[#allocation9 + $0x40] sm:$0xff]
        %v674 = vld [vmem:[#allocation9 + $0x48] sm:$0xff]
        %v675 = vld [vmem:[#allocation9 + $0x50] sm:$0xff]
        %v676 = vld [vmem:[#allocation9 + $0x58] sm:$0xff]
        %v677 = vld [vmem:[#allocation9 + $0x60] sm:$0xff]
        %v678 = vld [vmem:[#allocation9 + $0x68] sm:$0xff]
        %v679 = vld [vmem:[#allocation9 + $0x70] sm:$0xff]
        %v680 = vld [vmem:[#allocation9 + $0x78] sm:$0xff]
        %v681 = vld [vmem:[#allocation9 + $0x80] sm:$0xff]
        %v682 = vld [vmem:[#allocation9 + $0x88] sm:$0xff]
        %v683 = vld [vmem:[#allocation9 + $0x90] sm:$0xff]
        %v684 = vld [vmem:[#allocation9 + $0x98] sm:$0xff]
        %v685 = vld [vmem:[#allocation9 + $0xa0] sm:$0xff]
        %v686 = vld [vmem:[#allocation9 + $0xa8] sm:$0xff]
        %v687 = vld [vmem:[#allocation9 + $0xb0] sm:$0xff]
        %v688 = vld [vmem:[#allocation9 + $0xb8] sm:$0xff]
        %v689 = vld [vmem:[#allocation9 + $0xc0] sm:$0xff]
        %v690 = vld [vmem:[#allocation9 + $0xc8] sm:$0xff]
        %v691 = vld [vmem:[#allocation9 + $0xd0] sm:$0xff]
        %v692 = vld [vmem:[#allocation9 + $0xd8] sm:$0xff]
        %v693 = vld [vmem:[#allocation9 + $0xe0] sm:$0xff]
        %v694 = vld [vmem:[#allocation9 + $0xe8] sm:$0xff]
        %v695 = vld [vmem:[#allocation9 + $0xf0] sm:$0xff]
        %v696 = vld [vmem:[#allocation9 + $0xf8] sm:$0xff]
        %v697 = vld [vmem:[%s392] sm:$0xf]
        %v698 = vld [vmem:[%s392 + $0x4] sm:$0xf]
        %v699 = vld [vmem:[%s392 + $0x8] sm:$0xf]
        %v700 = vld [vmem:[%s392 + $0xc] sm:$0xf]
        %v701 = vld [vmem:[%s392 + $0x10] sm:$0xf]
        %v702 = vld [vmem:[%s392 + $0x14] sm:$0xf]
        %v703 = vld [vmem:[%s392 + $0x18] sm:$0xf]
        %v704 = vld [vmem:[%s392 + $0x1c] sm:$0xf]
        %v705 = vld [vmem:[%s392 + $0x20] sm:$0xf]
        %v706 = vld [vmem:[%s392 + $0x24] sm:$0xf]
        %v707 = vld [vmem:[%s392 + $0x28] sm:$0xf]
        %v708 = vld [vmem:[%s392 + $0x2c] sm:$0xf]
        %v709 = vld [vmem:[%s392 + $0x30] sm:$0xf]
        %v710 = vld [vmem:[%s392 + $0x34] sm:$0xf]
        %v711 = vld [vmem:[%s392 + $0x38] sm:$0xf]
        %v712 = vld [vmem:[%s392 + $0x3c] sm:$0xf]
        %v713 = vld [vmem:[%s392 + $0x40] sm:$0xf]
        %v714 = vld [vmem:[%s392 + $0x44] sm:$0xf]
        %v715 = vld [vmem:[%s392 + $0x48] sm:$0xf]
        %v716 = vld [vmem:[%s392 + $0x4c] sm:$0xf]
        %v717 = vld [vmem:[%s392 + $0x50] sm:$0xf]
        %v718 = vld [vmem:[%s392 + $0x54] sm:$0xf]
        %v719 = vld [vmem:[%s392 + $0x58] sm:$0xf]
        %v720 = vld [vmem:[%s392 + $0x5c] sm:$0xf]
        %v721 = vld [vmem:[%s392 + $0x60] sm:$0xf]
        %v722 = vld [vmem:[%s392 + $0x64] sm:$0xf]
        %v723 = vld [vmem:[%s392 + $0x68] sm:$0xf]
        %v724 = vld [vmem:[%s392 + $0x6c] sm:$0xf]
        %v725 = vld [vmem:[%s392 + $0x70] sm:$0xf]
        %v726 = vld [vmem:[%s392 + $0x74] sm:$0xf]
        %v727 = vld [vmem:[%s392 + $0x78] sm:$0xf]
        %v728 = vld [vmem:[%s392 + $0x7c] sm:$0xf]
        %v761 = vunpack.c.l.b16 %v697
        %v762 = vunpack.c.l.b16 %v698
        %v763 = vunpack.c.l.b16 %v699
        %v764 = vunpack.c.l.b16 %v700
        %v765 = vunpack.c.l.b16 %v701
        %v766 = vunpack.c.l.b16 %v702
        %v767 = vunpack.c.l.b16 %v703
        %v768 = vunpack.c.l.b16 %v704
        %v769 = vunpack.c.l.b16 %v705
        %v770 = vunpack.c.l.b16 %v706
        %v771 = vunpack.c.l.b16 %v707
        %v772 = vunpack.c.l.b16 %v708
        %v773 = vunpack.c.l.b16 %v709
        %v774 = vunpack.c.l.b16 %v710
        %v775 = vunpack.c.l.b16 %v711
        %v776 = vunpack.c.l.b16 %v712
        %v777 = vunpack.c.l.b16 %v713
        %v778 = vunpack.c.l.b16 %v714
        %v779 = vunpack.c.l.b16 %v715
        %v780 = vunpack.c.l.b16 %v716
        %v781 = vunpack.c.l.b16 %v717
        %v782 = vunpack.c.l.b16 %v718
        %v783 = vunpack.c.l.b16 %v719
        %v784 = vunpack.c.l.b16 %v720
        %v785 = vunpack.c.l.b16 %v721
        %v786 = vunpack.c.l.b16 %v722
        %v787 = vunpack.c.l.b16 %v723
        %v788 = vunpack.c.l.b16 %v724
        %v789 = vunpack.c.l.b16 %v725
        %v790 = vunpack.c.l.b16 %v726
        %v791 = vunpack.c.l.b16 %v727
        %v792 = vunpack.c.l.b16 %v728
        %v793 = vpack.c.b16 %v762, %v761
        %v794 = vpack.c.b16 %v764, %v763
        %v795 = vpack.c.b16 %v766, %v765
        %v796 = vpack.c.b16 %v768, %v767
        %v797 = vpack.c.b16 %v770, %v769
        %v798 = vpack.c.b16 %v772, %v771
        %v799 = vpack.c.b16 %v774, %v773
        %v800 = vpack.c.b16 %v776, %v775
        %v801 = vpack.c.b16 %v778, %v777
        %v802 = vpack.c.b16 %v780, %v779
        %v803 = vpack.c.b16 %v782, %v781
        %v804 = vpack.c.b16 %v784, %v783
        %v805 = vpack.c.b16 %v786, %v785
        %v806 = vpack.c.b16 %v788, %v787
        %v807 = vpack.c.b16 %v790, %v789
        %v808 = vpack.c.b16 %v792, %v791
        %825 = vmatpush.bf16.msra.mxu0 %v800
        %826 = vmatpush.bf16.msra.mxu0 %v799
        %827 = vmatpush.bf16.msra.mxu0 %v798
        %828 = vmatpush.bf16.msra.mxu0 %v797
        %829 = vmatpush.bf16.msra.mxu0 %v796
        %830 = vmatpush.bf16.msra.mxu0 %v795
        %831 = vmatpush.bf16.msra.mxu0 %v794
        %832 = vmatpush.bf16.msra.mxu0 %v793
        %833 = vmatmul.bf16.gmra.mxu0 %v633
        %v834 = vpop.f32.mrf.mxu0
        %v835 = vadd.f32 0.0, %v834
        %v836 = vpop.f32.mrf.mxu0
        %v837 = vadd.f32 0.0, %v836
        %838 = vmatmul.bf16.gmra.mxu0 %v635
        %v839 = vpop.f32.mrf.mxu0
        %v840 = vadd.f32 0.0, %v839
        %v841 = vpop.f32.mrf.mxu0
        %v842 = vadd.f32 0.0, %v841
        %843 = vmatmul.bf16.gmra.mxu0 %v637
        %v844 = vpop.f32.mrf.mxu0
        %v845 = vadd.f32 0.0, %v844
        %v846 = vpop.f32.mrf.mxu0
        %v847 = vadd.f32 0.0, %v846
        %848 = vmatmul.bf16.gmra.mxu0 %v639
        %v849 = vpop.f32.mrf.mxu0
        %v850 = vadd.f32 0.0, %v849
        %v851 = vpop.f32.mrf.mxu0
        %v852 = vadd.f32 0.0, %v851
        %853 = vmatmul.bf16.gmra.mxu0 %v641
        %v854 = vpop.f32.mrf.mxu0
        %v855 = vadd.f32 0.0, %v854
        %v856 = vpop.f32.mrf.mxu0
        %v857 = vadd.f32 0.0, %v856
        %858 = vmatmul.bf16.gmra.mxu0 %v643
        %v859 = vpop.f32.mrf.mxu0
        %v860 = vadd.f32 0.0, %v859
        %v861 = vpop.f32.mrf.mxu0
        %v862 = vadd.f32 0.0, %v861
        %863 = vmatmul.bf16.gmra.mxu0 %v645
        %v864 = vpop.f32.mrf.mxu0
        %v865 = vadd.f32 0.0, %v864
        %v866 = vpop.f32.mrf.mxu0
        %v867 = vadd.f32 0.0, %v866
        %868 = vmatmul.bf16.gmra.mxu0 %v647
        %v869 = vpop.f32.mrf.mxu0
        %v870 = vadd.f32 0.0, %v869
        %v871 = vpop.f32.mrf.mxu0
        %v872 = vadd.f32 0.0, %v871
        %873 = vmatmul.bf16.gmra.mxu0 %v649
        %v874 = vpop.f32.mrf.mxu0
        %v875 = vadd.f32 0.0, %v874
        %v876 = vpop.f32.mrf.mxu0
        %v877 = vadd.f32 0.0, %v876
        %878 = vmatmul.bf16.gmra.mxu0 %v651
        %v879 = vpop.f32.mrf.mxu0
        %v880 = vadd.f32 0.0, %v879
        %v881 = vpop.f32.mrf.mxu0
        %v882 = vadd.f32 0.0, %v881
        %883 = vmatmul.bf16.gmra.mxu0 %v653
        %v884 = vpop.f32.mrf.mxu0
        %v885 = vadd.f32 0.0, %v884
        %v886 = vpop.f32.mrf.mxu0
        %v887 = vadd.f32 0.0, %v886
        %888 = vmatmul.bf16.gmra.mxu0 %v655
        %v889 = vpop.f32.mrf.mxu0
        %v890 = vadd.f32 0.0, %v889
        %v891 = vpop.f32.mrf.mxu0
        %v892 = vadd.f32 0.0, %v891
        %893 = vmatmul.bf16.gmra.mxu0 %v657
        %v894 = vpop.f32.mrf.mxu0
        %v895 = vadd.f32 0.0, %v894
        %v896 = vpop.f32.mrf.mxu0
        %v897 = vadd.f32 0.0, %v896
        %898 = vmatmul.bf16.gmra.mxu0 %v659
        %v899 = vpop.f32.mrf.mxu0
        %v900 = vadd.f32 0.0, %v899
        %v901 = vpop.f32.mrf.mxu0
        %v902 = vadd.f32 0.0, %v901
        %903 = vmatmul.bf16.gmra.mxu0 %v661
        %v904 = vpop.f32.mrf.mxu0
        %v905 = vadd.f32 0.0, %v904
        %v906 = vpop.f32.mrf.mxu0
        %v907 = vadd.f32 0.0, %v906
        %908 = vmatmul.bf16.gmra.mxu0 %v663
        %v909 = vpop.f32.mrf.mxu0
        %v910 = vadd.f32 0.0, %v909
        %v911 = vpop.f32.mrf.mxu0
        %v912 = vadd.f32 0.0, %v911
        %913 = vdwg.mxu0
        %914 = vmatpush.bf16.msra.mxu0 %v808
        %915 = vmatpush.bf16.msra.mxu0 %v807
        %916 = vmatpush.bf16.msra.mxu0 %v806
        %917 = vmatpush.bf16.msra.mxu0 %v805
        %918 = vmatpush.bf16.msra.mxu0 %v804
        %919 = vmatpush.bf16.msra.mxu0 %v803
        %920 = vmatpush.bf16.msra.mxu0 %v802
        %921 = vmatpush.bf16.msra.mxu0 %v801
        %922 = vmatmul.bf16.gmra.mxu0 %v634
        %v923 = vpop.f32.mrf.mxu0
        %v924 = vadd.f32 %v835, %v923
        %v925 = vpop.f32.mrf.mxu0
        %v926 = vadd.f32 %v837, %v925
        %927 = vmatmul.bf16.gmra.mxu0 %v636
        %v928 = vpop.f32.mrf.mxu0
        %v929 = vadd.f32 %v840, %v928
        %v930 = vpop.f32.mrf.mxu0
        %v931 = vadd.f32 %v842, %v930
        %932 = vmatmul.bf16.gmra.mxu0 %v638
        %v933 = vpop.f32.mrf.mxu0
        %v934 = vadd.f32 %v845, %v933
        %v935 = vpop.f32.mrf.mxu0
        %v936 = vadd.f32 %v847, %v935
        %937 = vmatmul.bf16.gmra.mxu0 %v640
        %v938 = vpop.f32.mrf.mxu0
        %v939 = vadd.f32 %v850, %v938
        %v940 = vpop.f32.mrf.mxu0
        %v941 = vadd.f32 %v852, %v940
        %942 = vmatmul.bf16.gmra.mxu0 %v642
        %v943 = vpop.f32.mrf.mxu0
        %v944 = vadd.f32 %v855, %v943
        %v945 = vpop.f32.mrf.mxu0
        %v946 = vadd.f32 %v857, %v945
        %947 = vmatmul.bf16.gmra.mxu0 %v644
        %v948 = vpop.f32.mrf.mxu0
        %v949 = vadd.f32 %v860, %v948
        %v950 = vpop.f32.mrf.mxu0
        %v951 = vadd.f32 %v862, %v950
        %952 = vmatmul.bf16.gmra.mxu0 %v646
        %v953 = vpop.f32.mrf.mxu0
        %v954 = vadd.f32 %v865, %v953
        %v955 = vpop.f32.mrf.mxu0
        %v956 = vadd.f32 %v867, %v955
        %957 = vmatmul.bf16.gmra.mxu0 %v648
        %v958 = vpop.f32.mrf.mxu0
        %v959 = vadd.f32 %v870, %v958
        %v960 = vpop.f32.mrf.mxu0
        %v961 = vadd.f32 %v872, %v960
        %962 = vmatmul.bf16.gmra.mxu0 %v650
        %v963 = vpop.f32.mrf.mxu0
        %v964 = vadd.f32 %v875, %v963
        %v965 = vpop.f32.mrf.mxu0
        %v966 = vadd.f32 %v877, %v965
        %967 = vmatmul.bf16.gmra.mxu0 %v652
        %v968 = vpop.f32.mrf.mxu0
        %v969 = vadd.f32 %v880, %v968
        %v970 = vpop.f32.mrf.mxu0
        %v971 = vadd.f32 %v882, %v970
        %972 = vmatmul.bf16.gmra.mxu0 %v654
        %v973 = vpop.f32.mrf.mxu0
        %v974 = vadd.f32 %v885, %v973
        %v975 = vpop.f32.mrf.mxu0
        %v976 = vadd.f32 %v887, %v975
        %977 = vmatmul.bf16.gmra.mxu0 %v656
        %v978 = vpop.f32.mrf.mxu0
        %v979 = vadd.f32 %v890, %v978
        %v980 = vpop.f32.mrf.mxu0
        %v981 = vadd.f32 %v892, %v980
        %982 = vmatmul.bf16.gmra.mxu0 %v658
        %v983 = vpop.f32.mrf.mxu0
        %v984 = vadd.f32 %v895, %v983
        %v985 = vpop.f32.mrf.mxu0
        %v986 = vadd.f32 %v897, %v985
        %987 = vmatmul.bf16.gmra.mxu0 %v660
        %v988 = vpop.f32.mrf.mxu0
        %v989 = vadd.f32 %v900, %v988
        %v990 = vpop.f32.mrf.mxu0
        %v991 = vadd.f32 %v902, %v990
        %992 = vmatmul.bf16.gmra.mxu0 %v662
        %v993 = vpop.f32.mrf.mxu0
        %v994 = vadd.f32 %v905, %v993
        %v995 = vpop.f32.mrf.mxu0
        %v996 = vadd.f32 %v907, %v995
        %997 = vmatmul.bf16.gmra.mxu0 %v664
        %v998 = vpop.f32.mrf.mxu0
        %v999 = vadd.f32 %v910, %v998
        %v1000 = vpop.f32.mrf.mxu0
        %v1001 = vadd.f32 %v912, %v1000
        %1002 = vdwg.mxu0
        %v1003 = vadd.f32 %v665, %v924
        %v1004 = vadd.f32 %v666, %v926
        %v1005 = vadd.f32 %v667, %v929
        %v1006 = vadd.f32 %v668, %v931
        %v1007 = vadd.f32 %v669, %v934
        %v1008 = vadd.f32 %v670, %v936
        %v1009 = vadd.f32 %v671, %v939
        %v1010 = vadd.f32 %v672, %v941
        %v1011 = vadd.f32 %v673, %v944
        %v1012 = vadd.f32 %v674, %v946
        %v1013 = vadd.f32 %v675, %v949
        %v1014 = vadd.f32 %v676, %v951
        %v1015 = vadd.f32 %v677, %v954
        %v1016 = vadd.f32 %v678, %v956
        %v1017 = vadd.f32 %v679, %v959
        %v1018 = vadd.f32 %v680, %v961
        %v1019 = vadd.f32 %v681, %v964
        %v1020 = vadd.f32 %v682, %v966
        %v1021 = vadd.f32 %v683, %v969
        %v1022 = vadd.f32 %v684, %v971
        %v1023 = vadd.f32 %v685, %v974
        %v1024 = vadd.f32 %v686, %v976
        %v1025 = vadd.f32 %v687, %v979
        %v1026 = vadd.f32 %v688, %v981
        %v1027 = vadd.f32 %v689, %v984
        %v1028 = vadd.f32 %v690, %v986
        %v1029 = vadd.f32 %v691, %v989
        %v1030 = vadd.f32 %v692, %v991
        %v1031 = vadd.f32 %v693, %v994
        %v1032 = vadd.f32 %v694, %v996
        %v1033 = vadd.f32 %v695, %v999
        %v1034 = vadd.f32 %v696, %v1001
        %1035 = vst [vmem:[#allocation9] sm:$0xff] %v1003
        %1036 = vst [vmem:[#allocation9 + $0x8] sm:$0xff] %v1004
        %1037 = vst [vmem:[#allocation9 + $0x10] sm:$0xff] %v1005
        %1038 = vst [vmem:[#allocation9 + $0x18] sm:$0xff] %v1006
        %1039 = vst [vmem:[#allocation9 + $0x20] sm:$0xff] %v1007
        %1040 = vst [vmem:[#allocation9 + $0x28] sm:$0xff] %v1008
        %1041 = vst [vmem:[#allocation9 + $0x30] sm:$0xff] %v1009
        %1042 = vst [vmem:[#allocation9 + $0x38] sm:$0xff] %v1010
        %1043 = vst [vmem:[#allocation9 + $0x40] sm:$0xff] %v1011
        %1044 = vst [vmem:[#allocation9 + $0x48] sm:$0xff] %v1012
        %1045 = vst [vmem:[#allocation9 + $0x50] sm:$0xff] %v1013
        %1046 = vst [vmem:[#allocation9 + $0x58] sm:$0xff] %v1014
        %1047 = vst [vmem:[#allocation9 + $0x60] sm:$0xff] %v1015
        %1048 = vst [vmem:[#allocation9 + $0x68] sm:$0xff] %v1016
        %1049 = vst [vmem:[#allocation9 + $0x70] sm:$0xff] %v1017
        %1050 = vst [vmem:[#allocation9 + $0x78] sm:$0xff] %v1018
        %1051 = vst [vmem:[#allocation9 + $0x80] sm:$0xff] %v1019
        %1052 = vst [vmem:[#allocation9 + $0x88] sm:$0xff] %v1020
        %1053 = vst [vmem:[#allocation9 + $0x90] sm:$0xff] %v1021
        %1054 = vst [vmem:[#allocation9 + $0x98] sm:$0xff] %v1022
        %1055 = vst [vmem:[#allocation9 + $0xa0] sm:$0xff] %v1023
        %1056 = vst [vmem:[#allocation9 + $0xa8] sm:$0xff] %v1024
        %1057 = vst [vmem:[#allocation9 + $0xb0] sm:$0xff] %v1025
        %1058 = vst [vmem:[#allocation9 + $0xb8] sm:$0xff] %v1026
        %1059 = vst [vmem:[#allocation9 + $0xc0] sm:$0xff] %v1027
        %1060 = vst [vmem:[#allocation9 + $0xc8] sm:$0xff] %v1028
        %1061 = vst [vmem:[#allocation9 + $0xd0] sm:$0xff] %v1029
        %1062 = vst [vmem:[#allocation9 + $0xd8] sm:$0xff] %v1030
        %1063 = vst [vmem:[#allocation9 + $0xe0] sm:$0xff] %v1031
        %1064 = vst [vmem:[#allocation9 + $0xe8] sm:$0xff] %v1032
        %1065 = vst [vmem:[#allocation9 + $0xf0] sm:$0xff] %v1033
        %1066 = vst [vmem:[#allocation9 + $0xf8] sm:$0xff] %v1034
        %p1067 = scmp.eq.s32.totalorder %s29, 1
        // Predicated region
        $region84: #{tpu_custom_call.1} parent=62 // pred_check
          %p1068 = pneg %p1067
        $region85: #{tpu_custom_call.1} parent=62 // pred_check_branch
          %1070 = sbr.rel (%p1068) target = $region87
        $region86: #{tpu_custom_call.1} parent=62 // pred_region
          %v1071 = vld [vmem:[#allocation6] sm:$0xf]
          %v1072 = vld [vmem:[#allocation6 + $0x4] sm:$0xf]
          %v1073 = vld [vmem:[#allocation6 + $0x8] sm:$0xf]
          %v1074 = vld [vmem:[#allocation6 + $0xc] sm:$0xf]
          %v1075 = vld [vmem:[#allocation6 + $0x10] sm:$0xf]
          %v1076 = vld [vmem:[#allocation6 + $0x14] sm:$0xf]
          %v1077 = vld [vmem:[#allocation6 + $0x18] sm:$0xf]
          %v1078 = vld [vmem:[#allocation6 + $0x1c] sm:$0xf]
          %v1079 = vld [vmem:[#allocation6 + $0x20] sm:$0xf]
          %v1080 = vld [vmem:[#allocation6 + $0x24] sm:$0xf]
          %v1081 = vld [vmem:[#allocation6 + $0x28] sm:$0xf]
          %v1082 = vld [vmem:[#allocation6 + $0x2c] sm:$0xf]
          %v1083 = vld [vmem:[#allocation6 + $0x30] sm:$0xf]
          %v1084 = vld [vmem:[#allocation6 + $0x34] sm:$0xf]
          %v1085 = vld [vmem:[#allocation6 + $0x38] sm:$0xf]
          %v1086 = vld [vmem:[#allocation6 + $0x3c] sm:$0xf]
          %v1087 = vld [vmem:[#allocation6 + $0x40] sm:$0xf]
          %v1088 = vld [vmem:[#allocation6 + $0x44] sm:$0xf]
          %v1089 = vld [vmem:[#allocation6 + $0x48] sm:$0xf]
          %v1090 = vld [vmem:[#allocation6 + $0x4c] sm:$0xf]
          %v1091 = vld [vmem:[#allocation6 + $0x50] sm:$0xf]
          %v1092 = vld [vmem:[#allocation6 + $0x54] sm:$0xf]
          %v1093 = vld [vmem:[#allocation6 + $0x58] sm:$0xf]
          %v1094 = vld [vmem:[#allocation6 + $0x5c] sm:$0xf]
          %v1095 = vld [vmem:[#allocation6 + $0x60] sm:$0xf]
          %v1096 = vld [vmem:[#allocation6 + $0x64] sm:$0xf]
          %v1097 = vld [vmem:[#allocation6 + $0x68] sm:$0xf]
          %v1098 = vld [vmem:[#allocation6 + $0x6c] sm:$0xf]
          %v1099 = vld [vmem:[#allocation6 + $0x70] sm:$0xf]
          %v1100 = vld [vmem:[#allocation6 + $0x74] sm:$0xf]
          %v1101 = vld [vmem:[#allocation6 + $0x78] sm:$0xf]
          %v1102 = vld [vmem:[#allocation6 + $0x7c] sm:$0xf]
          %v1103 = vld [vmem:[#allocation8] sm:$0xf]
          %v1104 = vld [vmem:[#allocation8 + $0x4] sm:$0xf]
          %v1105 = vld [vmem:[#allocation8 + $0x8] sm:$0xf]
          %v1106 = vld [vmem:[#allocation8 + $0xc] sm:$0xf]
          %v1107 = vld [vmem:[#allocation8 + $0x10] sm:$0xf]
          %v1108 = vld [vmem:[#allocation8 + $0x14] sm:$0xf]
          %v1109 = vld [vmem:[#allocation8 + $0x18] sm:$0xf]
          %v1110 = vld [vmem:[#allocation8 + $0x1c] sm:$0xf]
          %v1111 = vld [vmem:[#allocation8 + $0x20] sm:$0xf]
          %v1112 = vld [vmem:[#allocation8 + $0x24] sm:$0xf]
          %v1113 = vld [vmem:[#allocation8 + $0x28] sm:$0xf]
          %v1114 = vld [vmem:[#allocation8 + $0x2c] sm:$0xf]
          %v1115 = vld [vmem:[#allocation8 + $0x30] sm:$0xf]
          %v1116 = vld [vmem:[#allocation8 + $0x34] sm:$0xf]
          %v1117 = vld [vmem:[#allocation8 + $0x38] sm:$0xf]
          %v1118 = vld [vmem:[#allocation8 + $0x3c] sm:$0xf]
          %v1151 = vunpack.c.l.b16 %v1071
          %v1152 = vunpack.c.l.b16 %v1072
          %v1153 = vunpack.c.l.b16 %v1073
          %v1154 = vunpack.c.l.b16 %v1074
          %v1155 = vunpack.c.l.b16 %v1075
          %v1156 = vunpack.c.l.b16 %v1076
          %v1157 = vunpack.c.l.b16 %v1077
          %v1158 = vunpack.c.l.b16 %v1078
          %v1159 = vunpack.c.l.b16 %v1079
          %v1160 = vunpack.c.l.b16 %v1080
          %v1161 = vunpack.c.l.b16 %v1081
          %v1162 = vunpack.c.l.b16 %v1082
          %v1163 = vunpack.c.l.b16 %v1083
          %v1164 = vunpack.c.l.b16 %v1084
          %v1165 = vunpack.c.l.b16 %v1085
          %v1166 = vunpack.c.l.b16 %v1086
          %v1167 = vunpack.c.l.b16 %v1087
          %v1168 = vunpack.c.l.b16 %v1088
          %v1169 = vunpack.c.l.b16 %v1089
          %v1170 = vunpack.c.l.b16 %v1090
          %v1171 = vunpack.c.l.b16 %v1091
          %v1172 = vunpack.c.l.b16 %v1092
          %v1173 = vunpack.c.l.b16 %v1093
          %v1174 = vunpack.c.l.b16 %v1094
          %v1175 = vunpack.c.l.b16 %v1095
          %v1176 = vunpack.c.l.b16 %v1096
          %v1177 = vunpack.c.l.b16 %v1097
          %v1178 = vunpack.c.l.b16 %v1098
          %v1179 = vunpack.c.l.b16 %v1099
          %v1180 = vunpack.c.l.b16 %v1100
          %v1181 = vunpack.c.l.b16 %v1101
          %v1182 = vunpack.c.l.b16 %v1102
          %v1183 = vpack.c.b16 %v1152, %v1151
          %v1184 = vpack.c.b16 %v1154, %v1153
          %v1185 = vpack.c.b16 %v1156, %v1155
          %v1186 = vpack.c.b16 %v1158, %v1157
          %v1187 = vpack.c.b16 %v1160, %v1159
          %v1188 = vpack.c.b16 %v1162, %v1161
          %v1189 = vpack.c.b16 %v1164, %v1163
          %v1190 = vpack.c.b16 %v1166, %v1165
          %v1191 = vpack.c.b16 %v1168, %v1167
          %v1192 = vpack.c.b16 %v1170, %v1169
          %v1193 = vpack.c.b16 %v1172, %v1171
          %v1194 = vpack.c.b16 %v1174, %v1173
          %v1195 = vpack.c.b16 %v1176, %v1175
          %v1196 = vpack.c.b16 %v1178, %v1177
          %v1197 = vpack.c.b16 %v1180, %v1179
          %v1198 = vpack.c.b16 %v1182, %v1181
          %v1231 = vunpack.c.l.b16 %v1103
          %v1232 = vunpack.c.l.b16 %v1104
          %v1233 = vunpack.c.l.b16 %v1105
          %v1234 = vunpack.c.l.b16 %v1106
          %v1235 = vunpack.c.l.b16 %v1107
          %v1236 = vunpack.c.l.b16 %v1108
          %v1237 = vunpack.c.l.b16 %v1109
          %v1238 = vunpack.c.l.b16 %v1110
          %v1239 = vunpack.c.l.b16 %v1111
          %v1240 = vunpack.c.l.b16 %v1112
          %v1241 = vunpack.c.l.b16 %v1113
          %v1242 = vunpack.c.l.b16 %v1114
          %v1243 = vunpack.c.l.b16 %v1115
          %v1244 = vunpack.c.l.b16 %v1116
          %v1245 = vunpack.c.l.b16 %v1117
          %v1246 = vunpack.c.l.b16 %v1118
          %v1247 = vpack.c.b16 %v1232, %v1231
          %v1248 = vpack.c.b16 %v1234, %v1233
          %v1249 = vpack.c.b16 %v1236, %v1235
          %v1250 = vpack.c.b16 %v1238, %v1237
          %v1251 = vpack.c.b16 %v1240, %v1239
          %v1252 = vpack.c.b16 %v1242, %v1241
          %v1253 = vpack.c.b16 %v1244, %v1243
          %v1254 = vpack.c.b16 %v1246, %v1245
          %1263 = vmatpush.bf16.msra.mxu0 %v1254
          %1264 = vmatpush.bf16.msra.mxu0 %v1253
          %1265 = vmatpush.bf16.msra.mxu0 %v1252
          %1266 = vmatpush.bf16.msra.mxu0 %v1251
          %1267 = vmatpush.bf16.msra.mxu0 %v1250
          %1268 = vmatpush.bf16.msra.mxu0 %v1249
          %1269 = vmatpush.bf16.msra.mxu0 %v1248
          %1270 = vmatpush.bf16.msra.mxu0 %v1247
          %1271 = vmatmul.bf16.gmra.mxu0 %v1183
          %v1272 = vpop.f32.mrf.mxu0
          %v1273 = vadd.f32 0.0, %v1272
          %v1274 = vpop.f32.mrf.mxu0
          %v1275 = vadd.f32 0.0, %v1274
          %1276 = vmatmul.bf16.gmra.mxu0 %v1184
          %v1277 = vpop.f32.mrf.mxu0
          %v1278 = vadd.f32 0.0, %v1277
          %v1279 = vpop.f32.mrf.mxu0
          %v1280 = vadd.f32 0.0, %v1279
          %1281 = vmatmul.bf16.gmra.mxu0 %v1185
          %v1282 = vpop.f32.mrf.mxu0
          %v1283 = vadd.f32 0.0, %v1282
          %v1284 = vpop.f32.mrf.mxu0
          %v1285 = vadd.f32 0.0, %v1284
          %1286 = vmatmul.bf16.gmra.mxu0 %v1186
          %v1287 = vpop.f32.mrf.mxu0
          %v1288 = vadd.f32 0.0, %v1287
          %v1289 = vpop.f32.mrf.mxu0
          %v1290 = vadd.f32 0.0, %v1289
          %1291 = vmatmul.bf16.gmra.mxu0 %v1187
          %v1292 = vpop.f32.mrf.mxu0
          %v1293 = vadd.f32 0.0, %v1292
          %v1294 = vpop.f32.mrf.mxu0
          %v1295 = vadd.f32 0.0, %v1294
          %1296 = vmatmul.bf16.gmra.mxu0 %v1188
          %v1297 = vpop.f32.mrf.mxu0
          %v1298 = vadd.f32 0.0, %v1297
          %v1299 = vpop.f32.mrf.mxu0
          %v1300 = vadd.f32 0.0, %v1299
          %1301 = vmatmul.bf16.gmra.mxu0 %v1189
          %v1302 = vpop.f32.mrf.mxu0
          %v1303 = vadd.f32 0.0, %v1302
          %v1304 = vpop.f32.mrf.mxu0
          %v1305 = vadd.f32 0.0, %v1304
          %1306 = vmatmul.bf16.gmra.mxu0 %v1190
          %v1307 = vpop.f32.mrf.mxu0
          %v1308 = vadd.f32 0.0, %v1307
          %v1309 = vpop.f32.mrf.mxu0
          %v1310 = vadd.f32 0.0, %v1309
          %1311 = vmatmul.bf16.gmra.mxu0 %v1191
          %v1312 = vpop.f32.mrf.mxu0
          %v1313 = vadd.f32 0.0, %v1312
          %v1314 = vpop.f32.mrf.mxu0
          %v1315 = vadd.f32 0.0, %v1314
          %1316 = vmatmul.bf16.gmra.mxu0 %v1192
          %v1317 = vpop.f32.mrf.mxu0
          %v1318 = vadd.f32 0.0, %v1317
          %v1319 = vpop.f32.mrf.mxu0
          %v1320 = vadd.f32 0.0, %v1319
          %1321 = vmatmul.bf16.gmra.mxu0 %v1193
          %v1322 = vpop.f32.mrf.mxu0
          %v1323 = vadd.f32 0.0, %v1322
          %v1324 = vpop.f32.mrf.mxu0
          %v1325 = vadd.f32 0.0, %v1324
          %1326 = vmatmul.bf16.gmra.mxu0 %v1194
          %v1327 = vpop.f32.mrf.mxu0
          %v1328 = vadd.f32 0.0, %v1327
          %v1329 = vpop.f32.mrf.mxu0
          %v1330 = vadd.f32 0.0, %v1329
          %1331 = vmatmul.bf16.gmra.mxu0 %v1195
          %v1332 = vpop.f32.mrf.mxu0
          %v1333 = vadd.f32 0.0, %v1332
          %v1334 = vpop.f32.mrf.mxu0
          %v1335 = vadd.f32 0.0, %v1334
          %1336 = vmatmul.bf16.gmra.mxu0 %v1196
          %v1337 = vpop.f32.mrf.mxu0
          %v1338 = vadd.f32 0.0, %v1337
          %v1339 = vpop.f32.mrf.mxu0
          %v1340 = vadd.f32 0.0, %v1339
          %1341 = vmatmul.bf16.gmra.mxu0 %v1197
          %v1342 = vpop.f32.mrf.mxu0
          %v1343 = vadd.f32 0.0, %v1342
          %v1344 = vpop.f32.mrf.mxu0
          %v1345 = vadd.f32 0.0, %v1344
          %1346 = vmatmul.bf16.gmra.mxu0 %v1198
          %v1347 = vpop.f32.mrf.mxu0
          %v1348 = vadd.f32 0.0, %v1347
          %v1349 = vpop.f32.mrf.mxu0
          %v1350 = vadd.f32 0.0, %v1349
          %1351 = vdwg.mxu0
          %v1352 = vld [vmem:[#allocation9] sm:$0xff]
          %v1353 = vld [vmem:[#allocation9 + $0x8] sm:$0xff]
          %v1354 = vld [vmem:[#allocation9 + $0x10] sm:$0xff]
          %v1355 = vld [vmem:[#allocation9 + $0x18] sm:$0xff]
          %v1356 = vld [vmem:[#allocation9 + $0x20] sm:$0xff]
          %v1357 = vld [vmem:[#allocation9 + $0x28] sm:$0xff]
          %v1358 = vld [vmem:[#allocation9 + $0x30] sm:$0xff]
          %v1359 = vld [vmem:[#allocation9 + $0x38] sm:$0xff]
          %v1360 = vld [vmem:[#allocation9 + $0x40] sm:$0xff]
          %v1361 = vld [vmem:[#allocation9 + $0x48] sm:$0xff]
          %v1362 = vld [vmem:[#allocation9 + $0x50] sm:$0xff]
          %v1363 = vld [vmem:[#allocation9 + $0x58] sm:$0xff]
          %v1364 = vld [vmem:[#allocation9 + $0x60] sm:$0xff]
          %v1365 = vld [vmem:[#allocation9 + $0x68] sm:$0xff]
          %v1366 = vld [vmem:[#allocation9 + $0x70] sm:$0xff]
          %v1367 = vld [vmem:[#allocation9 + $0x78] sm:$0xff]
          %v1368 = vld [vmem:[#allocation9 + $0x80] sm:$0xff]
          %v1369 = vld [vmem:[#allocation9 + $0x88] sm:$0xff]
          %v1370 = vld [vmem:[#allocation9 + $0x90] sm:$0xff]
          %v1371 = vld [vmem:[#allocation9 + $0x98] sm:$0xff]
          %v1372 = vld [vmem:[#allocation9 + $0xa0] sm:$0xff]
          %v1373 = vld [vmem:[#allocation9 + $0xa8] sm:$0xff]
          %v1374 = vld [vmem:[#allocation9 + $0xb0] sm:$0xff]
          %v1375 = vld [vmem:[#allocation9 + $0xb8] sm:$0xff]
          %v1376 = vld [vmem:[#allocation9 + $0xc0] sm:$0xff]
          %v1377 = vld [vmem:[#allocation9 + $0xc8] sm:$0xff]
          %v1378 = vld [vmem:[#allocation9 + $0xd0] sm:$0xff]
          %v1379 = vld [vmem:[#allocation9 + $0xd8] sm:$0xff]
          %v1380 = vld [vmem:[#allocation9 + $0xe0] sm:$0xff]
          %v1381 = vld [vmem:[#allocation9 + $0xe8] sm:$0xff]
          %v1382 = vld [vmem:[#allocation9 + $0xf0] sm:$0xff]
          %v1383 = vld [vmem:[#allocation9 + $0xf8] sm:$0xff]
          %v1384 = vld [vmem:[%s450] sm:$0xff]
          %v1385 = vld [vmem:[%s450 + $0x8] sm:$0xff]
          %v1386 = vld [vmem:[%s450 + $0x10] sm:$0xff]
          %v1387 = vld [vmem:[%s450 + $0x18] sm:$0xff]
          %v1388 = vld [vmem:[%s450 + $0x20] sm:$0xff]
          %v1389 = vld [vmem:[%s450 + $0x28] sm:$0xff]
          %v1390 = vld [vmem:[%s450 + $0x30] sm:$0xff]
          %v1391 = vld [vmem:[%s450 + $0x38] sm:$0xff]
          %v1392 = vld [vmem:[%s450 + $0x40] sm:$0xff]
          %v1393 = vld [vmem:[%s450 + $0x48] sm:$0xff]
          %v1394 = vld [vmem:[%s450 + $0x50] sm:$0xff]
          %v1395 = vld [vmem:[%s450 + $0x58] sm:$0xff]
          %v1396 = vld [vmem:[%s450 + $0x60] sm:$0xff]
          %v1397 = vld [vmem:[%s450 + $0x68] sm:$0xff]
          %v1398 = vld [vmem:[%s450 + $0x70] sm:$0xff]
          %v1399 = vld [vmem:[%s450 + $0x78] sm:$0xff]
          %v1400 = vld [vmem:[%s450 + $0x80] sm:$0xff]
          %v1401 = vld [vmem:[%s450 + $0x88] sm:$0xff]
          %v1402 = vld [vmem:[%s450 + $0x90] sm:$0xff]
          %v1403 = vld [vmem:[%s450 + $0x98] sm:$0xff]
          %v1404 = vld [vmem:[%s450 + $0xa0] sm:$0xff]
          %v1405 = vld [vmem:[%s450 + $0xa8] sm:$0xff]
          %v1406 = vld [vmem:[%s450 + $0xb0] sm:$0xff]
          %v1407 = vld [vmem:[%s450 + $0xb8] sm:$0xff]
          %v1408 = vld [vmem:[%s450 + $0xc0] sm:$0xff]
          %v1409 = vld [vmem:[%s450 + $0xc8] sm:$0xff]
          %v1410 = vld [vmem:[%s450 + $0xd0] sm:$0xff]
          %v1411 = vld [vmem:[%s450 + $0xd8] sm:$0xff]
          %v1412 = vld [vmem:[%s450 + $0xe0] sm:$0xff]
          %v1413 = vld [vmem:[%s450 + $0xe8] sm:$0xff]
          %v1414 = vld [vmem:[%s450 + $0xf0] sm:$0xff]
          %v1415 = vld [vmem:[%s450 + $0xf8] sm:$0xff]
          %1417 = vset.pattern.permute.xlu0 0
          %1418 = vperm.xlu0 %1417, %v1384
          %v1419 = vpop.permute.xlu0 %1418
          %1422 = vset.pattern.permute.xlu0 0
          %1423 = vperm.xlu0 %1422, %v1385
          %v1424 = vpop.permute.xlu0 %1423
          %1427 = vset.pattern.permute.xlu0 0
          %1428 = vperm.xlu0 %1427, %v1386
          %v1429 = vpop.permute.xlu0 %1428
          %1432 = vset.pattern.permute.xlu0 0
          %1433 = vperm.xlu0 %1432, %v1387
          %v1434 = vpop.permute.xlu0 %1433
          %1437 = vset.pattern.permute.xlu0 0
          %1438 = vperm.xlu0 %1437, %v1388
          %v1439 = vpop.permute.xlu0 %1438
          %1442 = vset.pattern.permute.xlu0 0
          %1443 = vperm.xlu0 %1442, %v1389
          %v1444 = vpop.permute.xlu0 %1443
          %1447 = vset.pattern.permute.xlu0 0
          %1448 = vperm.xlu0 %1447, %v1390
          %v1449 = vpop.permute.xlu0 %1448
          %1452 = vset.pattern.permute.xlu0 0
          %1453 = vperm.xlu0 %1452, %v1391
          %v1454 = vpop.permute.xlu0 %1453
          %1457 = vset.pattern.permute.xlu0 0
          %1458 = vperm.xlu0 %1457, %v1392
          %v1459 = vpop.permute.xlu0 %1458
          %1462 = vset.pattern.permute.xlu0 0
          %1463 = vperm.xlu0 %1462, %v1393
          %v1464 = vpop.permute.xlu0 %1463
          %1467 = vset.pattern.permute.xlu0 0
          %1468 = vperm.xlu0 %1467, %v1394
          %v1469 = vpop.permute.xlu0 %1468
          %1472 = vset.pattern.permute.xlu0 0
          %1473 = vperm.xlu0 %1472, %v1395
          %v1474 = vpop.permute.xlu0 %1473
          %1477 = vset.pattern.permute.xlu0 0
          %1478 = vperm.xlu0 %1477, %v1396
          %v1479 = vpop.permute.xlu0 %1478
          %1482 = vset.pattern.permute.xlu0 0
          %1483 = vperm.xlu0 %1482, %v1397
          %v1484 = vpop.permute.xlu0 %1483
          %1487 = vset.pattern.permute.xlu0 0
          %1488 = vperm.xlu0 %1487, %v1398
          %v1489 = vpop.permute.xlu0 %1488
          %1492 = vset.pattern.permute.xlu0 0
          %1493 = vperm.xlu0 %1492, %v1399
          %v1494 = vpop.permute.xlu0 %1493
          %1497 = vset.pattern.permute.xlu0 0
          %1498 = vperm.xlu0 %1497, %v1400
          %v1499 = vpop.permute.xlu0 %1498
          %1502 = vset.pattern.permute.xlu0 0
          %1503 = vperm.xlu0 %1502, %v1401
          %v1504 = vpop.permute.xlu0 %1503
          %1507 = vset.pattern.permute.xlu0 0
          %1508 = vperm.xlu0 %1507, %v1402
          %v1509 = vpop.permute.xlu0 %1508
          %1512 = vset.pattern.permute.xlu0 0
          %1513 = vperm.xlu0 %1512, %v1403
          %v1514 = vpop.permute.xlu0 %1513
          %1517 = vset.pattern.permute.xlu0 0
          %1518 = vperm.xlu0 %1517, %v1404
          %v1519 = vpop.permute.xlu0 %1518
          %1522 = vset.pattern.permute.xlu0 0
          %1523 = vperm.xlu0 %1522, %v1405
          %v1524 = vpop.permute.xlu0 %1523
          %1527 = vset.pattern.permute.xlu0 0
          %1528 = vperm.xlu0 %1527, %v1406
          %v1529 = vpop.permute.xlu0 %1528
          %1532 = vset.pattern.permute.xlu0 0
          %1533 = vperm.xlu0 %1532, %v1407
          %v1534 = vpop.permute.xlu0 %1533
          %1537 = vset.pattern.permute.xlu0 0
          %1538 = vperm.xlu0 %1537, %v1408
          %v1539 = vpop.permute.xlu0 %1538
          %1542 = vset.pattern.permute.xlu0 0
          %1543 = vperm.xlu0 %1542, %v1409
          %v1544 = vpop.permute.xlu0 %1543
          %1547 = vset.pattern.permute.xlu0 0
          %1548 = vperm.xlu0 %1547, %v1410
          %v1549 = vpop.permute.xlu0 %1548
          %1552 = vset.pattern.permute.xlu0 0
          %1553 = vperm.xlu0 %1552, %v1411
          %v1554 = vpop.permute.xlu0 %1553
          %1557 = vset.pattern.permute.xlu0 0
          %1558 = vperm.xlu0 %1557, %v1412
          %v1559 = vpop.permute.xlu0 %1558
          %1562 = vset.pattern.permute.xlu0 0
          %1563 = vperm.xlu0 %1562, %v1413
          %v1564 = vpop.permute.xlu0 %1563
          %1567 = vset.pattern.permute.xlu0 0
          %1568 = vperm.xlu0 %1567, %v1414
          %v1569 = vpop.permute.xlu0 %1568
          %1572 = vset.pattern.permute.xlu0 0
          %1573 = vperm.xlu0 %1572, %v1415
          %v1574 = vpop.permute.xlu0 %1573
          %v1576 = vmul.f32 %v1352, %v1419
          %v1577 = vmul.f32 %v1353, %v1424
          %v1578 = vmul.f32 %v1354, %v1429
          %v1579 = vmul.f32 %v1355, %v1434
          %v1580 = vmul.f32 %v1356, %v1439
          %v1581 = vmul.f32 %v1357, %v1444
          %v1582 = vmul.f32 %v1358, %v1449
          %v1583 = vmul.f32 %v1359, %v1454
          %v1584 = vmul.f32 %v1360, %v1459
          %v1585 = vmul.f32 %v1361, %v1464
          %v1586 = vmul.f32 %v1362, %v1469
          %v1587 = vmul.f32 %v1363, %v1474
          %v1588 = vmul.f32 %v1364, %v1479
          %v1589 = vmul.f32 %v1365, %v1484
          %v1590 = vmul.f32 %v1366, %v1489
          %v1591 = vmul.f32 %v1367, %v1494
          %v1592 = vmul.f32 %v1368, %v1499
          %v1593 = vmul.f32 %v1369, %v1504
          %v1594 = vmul.f32 %v1370, %v1509
          %v1595 = vmul.f32 %v1371, %v1514
          %v1596 = vmul.f32 %v1372, %v1519
          %v1597 = vmul.f32 %v1373, %v1524
          %v1598 = vmul.f32 %v1374, %v1529
          %v1599 = vmul.f32 %v1375, %v1534
          %v1600 = vmul.f32 %v1376, %v1539
          %v1601 = vmul.f32 %v1377, %v1544
          %v1602 = vmul.f32 %v1378, %v1549
          %v1603 = vmul.f32 %v1379, %v1554
          %v1604 = vmul.f32 %v1380, %v1559
          %v1605 = vmul.f32 %v1381, %v1564
          %v1606 = vmul.f32 %v1382, %v1569
          %v1607 = vmul.f32 %v1383, %v1574
          %v1608 = vadd.f32 %v1576, %v1273
          %v1609 = vadd.f32 %v1577, %v1275
          %v1610 = vadd.f32 %v1578, %v1278
          %v1611 = vadd.f32 %v1579, %v1280
          %v1612 = vadd.f32 %v1580, %v1283
          %v1613 = vadd.f32 %v1581, %v1285
          %v1614 = vadd.f32 %v1582, %v1288
          %v1615 = vadd.f32 %v1583, %v1290
          %v1616 = vadd.f32 %v1584, %v1293
          %v1617 = vadd.f32 %v1585, %v1295
          %v1618 = vadd.f32 %v1586, %v1298
          %v1619 = vadd.f32 %v1587, %v1300
          %v1620 = vadd.f32 %v1588, %v1303
          %v1621 = vadd.f32 %v1589, %v1305
          %v1622 = vadd.f32 %v1590, %v1308
          %v1623 = vadd.f32 %v1591, %v1310
          %v1624 = vadd.f32 %v1592, %v1313
          %v1625 = vadd.f32 %v1593, %v1315
          %v1626 = vadd.f32 %v1594, %v1318
          %v1627 = vadd.f32 %v1595, %v1320
          %v1628 = vadd.f32 %v1596, %v1323
          %v1629 = vadd.f32 %v1597, %v1325
          %v1630 = vadd.f32 %v1598, %v1328
          %v1631 = vadd.f32 %v1599, %v1330
          %v1632 = vadd.f32 %v1600, %v1333
          %v1633 = vadd.f32 %v1601, %v1335
          %v1634 = vadd.f32 %v1602, %v1338
          %v1635 = vadd.f32 %v1603, %v1340
          %v1636 = vadd.f32 %v1604, %v1343
          %v1637 = vadd.f32 %v1605, %v1345
          %v1638 = vadd.f32 %v1606, %v1348
          %v1639 = vadd.f32 %v1607, %v1350
          %v1640 = vld [vmem:[%s445] sm:$0x1]
          %v1642 = vperm.slane %v1640, 0
          %v1644 = vadd.f32 %v1608, %v1642
          %v1645 = vadd.f32 %v1609, %v1642
          %v1646 = vadd.f32 %v1610, %v1642
          %v1647 = vadd.f32 %v1611, %v1642
          %v1648 = vadd.f32 %v1612, %v1642
          %v1649 = vadd.f32 %v1613, %v1642
          %v1650 = vadd.f32 %v1614, %v1642
          %v1651 = vadd.f32 %v1615, %v1642
          %v1652 = vadd.f32 %v1616, %v1642
          %v1653 = vadd.f32 %v1617, %v1642
          %v1654 = vadd.f32 %v1618, %v1642
          %v1655 = vadd.f32 %v1619, %v1642
          %v1656 = vadd.f32 %v1620, %v1642
          %v1657 = vadd.f32 %v1621, %v1642
          %v1658 = vadd.f32 %v1622, %v1642
          %v1659 = vadd.f32 %v1623, %v1642
          %v1660 = vadd.f32 %v1624, %v1642
          %v1661 = vadd.f32 %v1625, %v1642
          %v1662 = vadd.f32 %v1626, %v1642
          %v1663 = vadd.f32 %v1627, %v1642
          %v1664 = vadd.f32 %v1628, %v1642
          %v1665 = vadd.f32 %v1629, %v1642
          %v1666 = vadd.f32 %v1630, %v1642
          %v1667 = vadd.f32 %v1631, %v1642
          %v1668 = vadd.f32 %v1632, %v1642
          %v1669 = vadd.f32 %v1633, %v1642
          %v1670 = vadd.f32 %v1634, %v1642
          %v1671 = vadd.f32 %v1635, %v1642
          %v1672 = vadd.f32 %v1636, %v1642
          %v1673 = vadd.f32 %v1637, %v1642
          %v1674 = vadd.f32 %v1638, %v1642
          %v1675 = vadd.f32 %v1639, %v1642
          %1676 = vst [vmem:[#allocation9] sm:$0xff] %v1644
          %1677 = vst [vmem:[#allocation9 + $0x8] sm:$0xff] %v1645
          %1678 = vst [vmem:[#allocation9 + $0x10] sm:$0xff] %v1646
          %1679 = vst [vmem:[#allocation9 + $0x18] sm:$0xff] %v1647
          %1680 = vst [vmem:[#allocation9 + $0x20] sm:$0xff] %v1648
          %1681 = vst [vmem:[#allocation9 + $0x28] sm:$0xff] %v1649
          %1682 = vst [vmem:[#allocation9 + $0x30] sm:$0xff] %v1650
          %1683 = vst [vmem:[#allocation9 + $0x38] sm:$0xff] %v1651
          %1684 = vst [vmem:[#allocation9 + $0x40] sm:$0xff] %v1652
          %1685 = vst [vmem:[#allocation9 + $0x48] sm:$0xff] %v1653
          %1686 = vst [vmem:[#allocation9 + $0x50] sm:$0xff] %v1654
          %1687 = vst [vmem:[#allocation9 + $0x58] sm:$0xff] %v1655
          %1688 = vst [vmem:[#allocation9 + $0x60] sm:$0xff] %v1656
          %1689 = vst [vmem:[#allocation9 + $0x68] sm:$0xff] %v1657
          %1690 = vst [vmem:[#allocation9 + $0x70] sm:$0xff] %v1658
          %1691 = vst [vmem:[#allocation9 + $0x78] sm:$0xff] %v1659
          %1692 = vst [vmem:[#allocation9 + $0x80] sm:$0xff] %v1660
          %1693 = vst [vmem:[#allocation9 + $0x88] sm:$0xff] %v1661
          %1694 = vst [vmem:[#allocation9 + $0x90] sm:$0xff] %v1662
          %1695 = vst [vmem:[#allocation9 + $0x98] sm:$0xff] %v1663
          %1696 = vst [vmem:[#allocation9 + $0xa0] sm:$0xff] %v1664
          %1697 = vst [vmem:[#allocation9 + $0xa8] sm:$0xff] %v1665
          %1698 = vst [vmem:[#allocation9 + $0xb0] sm:$0xff] %v1666
          %1699 = vst [vmem:[#allocation9 + $0xb8] sm:$0xff] %v1667
          %1700 = vst [vmem:[#allocation9 + $0xc0] sm:$0xff] %v1668
          %1701 = vst [vmem:[#allocation9 + $0xc8] sm:$0xff] %v1669
          %1702 = vst [vmem:[#allocation9 + $0xd0] sm:$0xff] %v1670
          %1703 = vst [vmem:[#allocation9 + $0xd8] sm:$0xff] %v1671
          %1704 = vst [vmem:[#allocation9 + $0xe0] sm:$0xff] %v1672
          %1705 = vst [vmem:[#allocation9 + $0xe8] sm:$0xff] %v1673
          %1706 = vst [vmem:[#allocation9 + $0xf0] sm:$0xff] %v1674
          %1707 = vst [vmem:[#allocation9 + $0xf8] sm:$0xff] %v1675
        $region87: #{tpu_custom_call.1} parent=62 // pred_fallthru
          _
        // Predicated region
        $region88: #{tpu_custom_call.1} parent=62 // pred_check
          %p1708 = pneg %p221
        $region89: #{tpu_custom_call.1} parent=62 // pred_check_branch
          %1710 = sbr.rel (%p1708) target = $region91
        $region90: #{tpu_custom_call.1} parent=62 // pred_region
          %s1711 = smul.u32 32, %s27
          %1713 = vsyncadd [#allocation5], 0
          %s1714 = sadd.s32 %s28, %s1711
          %s1715 = smul.addr %s1714, 8
          %s1716 = scalar_lea.hbm %s6, %s1715
          %s1717 = sshll.u32 [#allocation9], 4
          %s1718 = int_to_ptr.vmem [resolvable:$true] %s1717
          %s1719 = sshll.u32 %s1716, 4
          %s1720 = int_to_ptr.hbm [resolvable:$true] %s1719
          %1725 = dma.vmem_to_hbm [thread:$0]  %s1718, 4096, %s1720, [#allocation5], 128, 128, 8
        $region91: #{tpu_custom_call.1} parent=62 // pred_fallthru
          _
        // Predicated region
        $region92: #{tpu_custom_call.1} parent=62 // pred_check
          %p1726 = pneg %p221
        $region93: #{tpu_custom_call.1} parent=62 // pred_check_branch
          %1728 = sbr.rel (%p1726) target = $region95
        $region94: #{tpu_custom_call.1} parent=62 // pred_region
          %1730 = dma.done [#allocation5], 4096
        $region95: #{tpu_custom_call.1} parent=62 // pred_fallthru
          _
      $region63: #{tpu_custom_call.1} parent=5 // pred_fallthru
        _
      %p1731 = scmp.le.s32.totalorder 2, %s17
      // Predicated region
      $region96: #{tpu_custom_call.1} parent=5 // pred_check
        %p1732 = pneg %p1731
      $region97: #{tpu_custom_call.1} parent=5 // pred_check_branch
        %1734 = sbr.rel (%p1732) target = $region99
      $region98: #{tpu_custom_call.1} parent=5 // pred_region
        %s1735 = ssub.s32 %s17, 2
      $region99: #{tpu_custom_call.1} parent=5 // pred_fallthru
        _
    $region6: #{tpu_custom_call.1} parent=1 // loop_footer
      %s21 = sadd.s32 1, %s17
    $region7: #{tpu_custom_call.1} parent=1 // loop_footer_branch
      %16 = sbr.rel target = $region3
    $region8: #{tpu_custom_call.1} parent=1 // loop_exit
      _
    %1736 = vsyncpa [#allocation4], 1
    %s1737 = scalar_lea.sflag [#allocation4], 1
    %1738 = vsyncpa %s1737, 1
    %1739 = vsyncpa [#allocation7], 1
    %1740 = vsyncpa [#allocation5], 1
    %s1741 = scalar_lea.sflag [#allocation5], 1
    %1742 = vsyncpa %s1741, 1

</llo_original>
